<compile_context>
chip_gen: v7x
topology: tpu7x:2x2x1
jax: 0.10.0
libtpu: 0.0.40
codegen_flags: <defaults>
</compile_context>

<pallas_src>
import jax
import jax.numpy as jnp
from jax.experimental import pallas as pl
from jax.experimental.pallas import tpu as pltpu


NEG_SLOPE = 0.01  # PyTorch nn.LeakyReLU default negative_slope


def _coupling_fwd_kernel(x_ref, xc_ref,
                         w1_ref, b1_ref, w2_ref, b2_ref, w3_ref, b3_ref,
                         xout_ref, logdet_ref):
    """One batch tile of the double coupling block forward pass.

    Stacked-net layout along leading axis: k=0 -> s[0], k=1 -> s[1],
    k=2 -> t[0], k=3 -> t[1].
    """
    x = x_ref[...]          # (TB, C)
    xc = xc_ref[...]        # (TB, Cc)
    half = x.shape[1] // 2

    def leaky(h):
        return jnp.where(h >= 0, h, NEG_SLOPE * h)

    def mlp(k, use_tanh):
        # BasicFullyConnectedNet, depth=2: 3 Linear layers, LeakyReLU after each,
        # optional Tanh at the end (s-nets only).
        h = jnp.dot(xc, w1_ref[k], preferred_element_type=jnp.float32) + b1_ref[k]
        h = leaky(h)
        h = jnp.dot(h, w2_ref[k], preferred_element_type=jnp.float32) + b2_ref[k]
        h = leaky(h)
        h = jnp.dot(h, w3_ref[k], preferred_element_type=jnp.float32) + b3_ref[k]
        h = leaky(h)
        if use_tanh:
            h = jnp.tanh(h)
        return h

    s0 = mlp(0, True)
    s1 = mlp(1, True)
    t0 = mlp(2, False)
    t1 = mlp(3, False)

    x0 = x[:, :half]
    x1 = x[:, half:]
    y1 = x1 * jnp.exp(s0) + t0   # coupling step i=0 (applied to second half)
    y0 = x0 * jnp.exp(s1) + t1   # coupling step i=1 (after half swap)

    xout_ref[...] = jnp.concatenate([y1, y0], axis=1).astype(xout_ref.dtype)
    logdet_ref[...] = (jnp.sum(s0, axis=1, keepdims=True) +
                       jnp.sum(s1, axis=1, keepdims=True)).astype(logdet_ref.dtype)


def coupling_block_forward(x, xc, params, *, block_rows=256):
    """Forward pass of ConditionalDoubleVectorCouplingBlock_cond (reverse=False).

    x:  (B, C, 1, 1), xc: (B, Cc, 1, 1)
    params = (w1s (4,Cc,H), b1s (4,1,H), w2s (4,H,H), b2s (4,1,H),
              w3s (4,H,C//2), b3s (4,1,C//2))
    Returns (x_out (B, C), logdet (B,)) — same shapes as the PyTorch module.
    """
    B, C = x.shape[0], x.shape[1]
    Cc = xc.shape[1]
    w1s, b1s, w2s, b2s, w3s, b3s = params
    H = w1s.shape[2]
    half = C // 2

    x2 = x.reshape(B, C)        # free metadata reshape (trailing 1x1 squeeze)
    xc2 = xc.reshape(B, Cc)

    # Batch tile: large enough to amortize per-step pipeline overhead for big B,
    # clamped to B for small inputs. Per-block VMEM is tiny (KiBs), so even
    # block_rows ~1024 stays far below the scoped VMEM limit on v5e/v6e/v7x.
    TB = min(block_rows, B)
    grid = (pl.cdiv(B, TB),)

    x_out, logdet = pl.pallas_call(
        _coupling_fwd_kernel,
        out_shape=(jax.ShapeDtypeStruct((B, C), x2.dtype),
                   jax.ShapeDtypeStruct((B, 1), jnp.float32)),
        grid=grid,
        in_specs=[
            pl.BlockSpec((TB, C), lambda i: (i, 0)),
            pl.BlockSpec((TB, Cc), lambda i: (i, 0)),
            # Weights: full-array blocks, resident across all batch tiles.
            pl.BlockSpec((4, Cc, H), lambda i: (0, 0, 0)),
            pl.BlockSpec((4, 1, H), lambda i: (0, 0, 0)),
            pl.BlockSpec((4, H, H), lambda i: (0, 0, 0)),
            pl.BlockSpec((4, 1, H), lambda i: (0, 0, 0)),
            pl.BlockSpec((4, H, half), lambda i: (0, 0, 0)),
            pl.BlockSpec((4, 1, half), lambda i: (0, 0, 0)),
        ],
        out_specs=(pl.BlockSpec((TB, C), lambda i: (i, 0)),
                   pl.BlockSpec((TB, 1), lambda i: (i, 0))),
        compiler_params=pltpu.CompilerParams(
            dimension_semantics=("parallel",)),
    )(x2, xc2, w1s, b1s, w2s, b2s, w3s, b3s)

    return x_out, logdet.reshape(B)


def reference_forward(x, xc, params):
    """Pure-jnp reference, mirroring the PyTorch loop structure exactly."""
    B, C = x.shape[0], x.shape[1]
    x2 = x.reshape(B, C)
    xc2 = xc.reshape(B, xc.shape[1])
    w1s, b1s, w2s, b2s, w3s, b3s = params

    def leaky(h):
        return jnp.where(h >= 0, h, NEG_SLOPE * h)

    def mlp(k, use_tanh):
        h = leaky(xc2 @ w1s[k] + b1s[k])
        h = leaky(h @ w2s[k] + b2s[k])
        h = leaky(h @ w3s[k] + b3s[k])
        return jnp.tanh(h) if use_tanh else h

    s = [mlp(0, True), mlp(1, True)]
    t = [mlp(2, False), mlp(3, False)]

    half = C // 2
    logdet = jnp.zeros((B,), jnp.float32)
    xcur = x2
    for i in range(2):
        if i % 2 != 0:
            xcur = jnp.concatenate([xcur[:, half:], xcur[:, :half]], axis=1)
        xa, xk = xcur[:, :half], xcur[:, half:]
        x_ = xk * jnp.exp(s[i]) + t[i]
        xcur = jnp.concatenate([xa, x_], axis=1)
        logdet = logdet + jnp.sum(s[i], axis=1)
    return xcur, logdet


if __name__ == "__main__":
    key = jax.random.PRNGKey(0)
    # Small shapes consistent with the module: in_channels=4, cond_channels=8,
    # hidden_dim=32, depth=2; batch=16 with block_rows=8 gives a 2-step parallel grid.
    B, C, Cc, H = 16, 4, 8, 32
    half = C // 2

    keys = jax.random.split(key, 8)
    x = jax.random.normal(keys[0], (B, C, 1, 1), jnp.float32)
    xc = jax.random.normal(keys[1], (B, Cc, 1, 1), jnp.float32)

    wscale = 0.3
    w1s = wscale * jax.random.normal(keys[2], (4, Cc, H), jnp.float32)
    b1s = wscale * jax.random.normal(keys[3], (4, 1, H), jnp.float32)
    w2s = wscale * jax.random.normal(keys[4], (4, H, H), jnp.float32)
    b2s = wscale * jax.random.normal(keys[5], (4, 1, H), jnp.float32)
    w3s = wscale * jax.random.normal(keys[6], (4, H, half), jnp.float32)
    b3s = wscale * jax.random.normal(keys[7], (4, 1, half), jnp.float32)
    params = (w1s, b1s, w2s, b2s, w3s, b3s)

    x_out, logdet = coupling_block_forward(x, xc, params, block_rows=8)
    x_out = jax.block_until_ready(x_out)
    logdet = jax.block_until_ready(logdet)

    x_ref, ld_ref = reference_forward(x, xc, params)
    assert x_out.shape == (B, C) and logdet.shape == (B,)
    assert jnp.allclose(x_out, x_ref, atol=1e-5, rtol=1e-5), "x mismatch"
    assert jnp.allclose(logdet, ld_ref, atol=1e-5, rtol=1e-5), "logdet mismatch"

    # TODO(synk): reverse=False path only; the reverse (inverse) branch of the
    # module is not implemented here.
    print("KERNEL_OK")
</pallas_src>

<mosaic_0001>
module attributes {stable_mosaic.version = 11 : i64} {
  func.func @_coupling_fwd_kernel(%arg0: i32, %arg1: memref<8x4xf32, #tpu.memory_space<vmem>>, %arg2: memref<8x8xf32, #tpu.memory_space<vmem>>, %arg3: memref<4x8x32xf32, #tpu.memory_space<vmem>>, %arg4: memref<4x1x32xf32, #tpu.memory_space<vmem>>, %arg5: memref<4x32x32xf32, #tpu.memory_space<vmem>>, %arg6: memref<4x1x32xf32, #tpu.memory_space<vmem>>, %arg7: memref<4x32x2xf32, #tpu.memory_space<vmem>>, %arg8: memref<4x1x2xf32, #tpu.memory_space<vmem>>, %arg9: memref<8x4xf32, #tpu.memory_space<vmem>>, %arg10: memref<8x1xf32, #tpu.memory_space<vmem>>) attributes {dimension_semantics = [#tpu.dimension_semantics<parallel>], iteration_bounds = array<i64: 2>, scalar_prefetch = 0 : i64, scratch_operands = 0 : i64, tpu.core_type = #tpu.core_type<tc>, window_params = [{transform_indices = @transform_0, window_bounds = array<i64: 8, 4>}, {transform_indices = @transform_1, window_bounds = array<i64: 8, 8>}, {pipeline_mode = #tpu.pipeline_mode<synchronous>, transform_indices = @transform_2, window_bounds = array<i64: 4, 8, 32>}, {pipeline_mode = #tpu.pipeline_mode<synchronous>, transform_indices = @transform_3, window_bounds = array<i64: 4, 1, 32>}, {pipeline_mode = #tpu.pipeline_mode<synchronous>, transform_indices = @transform_4, window_bounds = array<i64: 4, 32, 32>}, {pipeline_mode = #tpu.pipeline_mode<synchronous>, transform_indices = @transform_5, window_bounds = array<i64: 4, 1, 32>}, {pipeline_mode = #tpu.pipeline_mode<synchronous>, transform_indices = @transform_6, window_bounds = array<i64: 4, 32, 2>}, {pipeline_mode = #tpu.pipeline_mode<synchronous>, transform_indices = @transform_7, window_bounds = array<i64: 4, 1, 2>}, {transform_indices = @transform_8, window_bounds = array<i64: 8, 4>}, {transform_indices = @transform_9, window_bounds = array<i64: 8, 1>}]} {
    %c0 = arith.constant 0 : index
    %c0_0 = arith.constant 0 : index
    %0 = vector.load %arg1[%c0, %c0_0] : memref<8x4xf32, #tpu.memory_space<vmem>>, vector<8x4xf32>
    %c0_1 = arith.constant 0 : index
    %c0_2 = arith.constant 0 : index
    %1 = vector.load %arg2[%c0_1, %c0_2] : memref<8x8xf32, #tpu.memory_space<vmem>>, vector<8x8xf32>
    %c0_3 = arith.constant 0 : index
    %c0_4 = arith.constant 0 : index
    %c0_5 = arith.constant 0 : index
    %2 = vector.load %arg3[%c0_3, %c0_4, %c0_5] : memref<4x8x32xf32, #tpu.memory_space<vmem>>, vector<1x8x32xf32>
    %3 = vector.shape_cast %2 : vector<1x8x32xf32> to vector<8x32xf32>
    %cst = arith.constant dense<0.000000e+00> : vector<8x32xf32>
    %4 = tpu.matmul %1, %3, %cst {dimension_numbers = #tpu.dot_dimension_numbers<[1], [0], [0], [1], [0, 0, 1, 1], [], []>} : vector<8x8xf32>, vector<8x32xf32>, vector<8x32xf32> -> vector<8x32xf32>
    %c0_6 = arith.constant 0 : index
    %c0_7 = arith.constant 0 : index
    %c0_8 = arith.constant 0 : index
    %5 = vector.load %arg4[%c0_6, %c0_7, %c0_8] : memref<4x1x32xf32, #tpu.memory_space<vmem>>, vector<1x1x32xf32>
    %6 = vector.shape_cast %5 : vector<1x1x32xf32> to vector<1x32xf32>
    %7 = vector.broadcast %6 : vector<1x32xf32> to vector<8x32xf32>
    %8 = arith.addf %4, %7 : vector<8x32xf32>
    %cst_9 = arith.constant 0.000000e+00 : f32
    %9 = vector.broadcast %cst_9 : f32 to vector<8x32xf32>
    %10 = arith.cmpf oge, %8, %9 : vector<8x32xf32>
    %cst_10 = arith.constant 0.00999999977 : f32
    %11 = vector.broadcast %cst_10 : f32 to vector<8x32xf32>
    %12 = arith.mulf %11, %8 : vector<8x32xf32>
    %13 = arith.select %10, %8, %12 : vector<8x32xi1>, vector<8x32xf32>
    %c0_11 = arith.constant 0 : index
    %c0_12 = arith.constant 0 : index
    %c0_13 = arith.constant 0 : index
    %14 = vector.load %arg5[%c0_11, %c0_12, %c0_13] : memref<4x32x32xf32, #tpu.memory_space<vmem>>, vector<1x32x32xf32>
    %15 = vector.shape_cast %14 : vector<1x32x32xf32> to vector<32x32xf32>
    %cst_14 = arith.constant dense<0.000000e+00> : vector<8x32xf32>
    %16 = tpu.matmul %13, %15, %cst_14 {dimension_numbers = #tpu.dot_dimension_numbers<[1], [0], [0], [1], [0, 0, 1, 1], [], []>} : vector<8x32xf32>, vector<32x32xf32>, vector<8x32xf32> -> vector<8x32xf32>
    %c0_15 = arith.constant 0 : index
    %c0_16 = arith.constant 0 : index
    %c0_17 = arith.constant 0 : index
    %17 = vector.load %arg6[%c0_15, %c0_16, %c0_17] : memref<4x1x32xf32, #tpu.memory_space<vmem>>, vector<1x1x32xf32>
    %18 = vector.shape_cast %17 : vector<1x1x32xf32> to vector<1x32xf32>
    %19 = vector.broadcast %18 : vector<1x32xf32> to vector<8x32xf32>
    %20 = arith.addf %16, %19 : vector<8x32xf32>
    %cst_18 = arith.constant 0.000000e+00 : f32
    %21 = vector.broadcast %cst_18 : f32 to vector<8x32xf32>
    %22 = arith.cmpf oge, %20, %21 : vector<8x32xf32>
    %cst_19 = arith.constant 0.00999999977 : f32
    %23 = vector.broadcast %cst_19 : f32 to vector<8x32xf32>
    %24 = arith.mulf %23, %20 : vector<8x32xf32>
    %25 = arith.select %22, %20, %24 : vector<8x32xi1>, vector<8x32xf32>
    %c0_20 = arith.constant 0 : index
    %c0_21 = arith.constant 0 : index
    %c0_22 = arith.constant 0 : index
    %26 = vector.load %arg7[%c0_20, %c0_21, %c0_22] : memref<4x32x2xf32, #tpu.memory_space<vmem>>, vector<1x32x2xf32>
    %27 = vector.shape_cast %26 : vector<1x32x2xf32> to vector<32x2xf32>
    %cst_23 = arith.constant dense<0.000000e+00> : vector<8x2xf32>
    %28 = tpu.matmul %25, %27, %cst_23 {dimension_numbers = #tpu.dot_dimension_numbers<[1], [0], [0], [1], [0, 0, 1, 1], [], []>} : vector<8x32xf32>, vector<32x2xf32>, vector<8x2xf32> -> vector<8x2xf32>
    %c0_24 = arith.constant 0 : index
    %c0_25 = arith.constant 0 : index
    %c0_26 = arith.constant 0 : index
    %29 = vector.load %arg8[%c0_24, %c0_25, %c0_26] : memref<4x1x2xf32, #tpu.memory_space<vmem>>, vector<1x1x2xf32>
    %30 = vector.shape_cast %29 : vector<1x1x2xf32> to vector<1x2xf32>
    %31 = vector.broadcast %30 : vector<1x2xf32> to vector<8x2xf32>
    %32 = arith.addf %28, %31 : vector<8x2xf32>
    %cst_27 = arith.constant 0.000000e+00 : f32
    %33 = vector.broadcast %cst_27 : f32 to vector<8x2xf32>
    %34 = arith.cmpf oge, %32, %33 : vector<8x2xf32>
    %cst_28 = arith.constant 0.00999999977 : f32
    %35 = vector.broadcast %cst_28 : f32 to vector<8x2xf32>
    %36 = arith.mulf %35, %32 : vector<8x2xf32>
    %37 = arith.select %34, %32, %36 : vector<8x2xi1>, vector<8x2xf32>
    %38 = math.tanh %37 : vector<8x2xf32>
    %c1 = arith.constant 1 : index
    %c0_29 = arith.constant 0 : index
    %c0_30 = arith.constant 0 : index
    %39 = vector.load %arg3[%c1, %c0_29, %c0_30] : memref<4x8x32xf32, #tpu.memory_space<vmem>>, vector<1x8x32xf32>
    %40 = vector.shape_cast %39 : vector<1x8x32xf32> to vector<8x32xf32>
    %cst_31 = arith.constant dense<0.000000e+00> : vector<8x32xf32>
    %41 = tpu.matmul %1, %40, %cst_31 {dimension_numbers = #tpu.dot_dimension_numbers<[1], [0], [0], [1], [0, 0, 1, 1], [], []>} : vector<8x8xf32>, vector<8x32xf32>, vector<8x32xf32> -> vector<8x32xf32>
    %c1_32 = arith.constant 1 : index
    %c0_33 = arith.constant 0 : index
    %c0_34 = arith.constant 0 : index
    %42 = vector.load %arg4[%c1_32, %c0_33, %c0_34] : memref<4x1x32xf32, #tpu.memory_space<vmem>>, vector<1x1x32xf32>
    %43 = vector.shape_cast %42 : vector<1x1x32xf32> to vector<1x32xf32>
    %44 = vector.broadcast %43 : vector<1x32xf32> to vector<8x32xf32>
    %45 = arith.addf %41, %44 : vector<8x32xf32>
    %cst_35 = arith.constant 0.000000e+00 : f32
    %46 = vector.broadcast %cst_35 : f32 to vector<8x32xf32>
    %47 = arith.cmpf oge, %45, %46 : vector<8x32xf32>
    %cst_36 = arith.constant 0.00999999977 : f32
    %48 = vector.broadcast %cst_36 : f32 to vector<8x32xf32>
    %49 = arith.mulf %48, %45 : vector<8x32xf32>
    %50 = arith.select %47, %45, %49 : vector<8x32xi1>, vector<8x32xf32>
    %c1_37 = arith.constant 1 : index
    %c0_38 = arith.constant 0 : index
    %c0_39 = arith.constant 0 : index
    %51 = vector.load %arg5[%c1_37, %c0_38, %c0_39] : memref<4x32x32xf32, #tpu.memory_space<vmem>>, vector<1x32x32xf32>
    %52 = vector.shape_cast %51 : vector<1x32x32xf32> to vector<32x32xf32>
    %cst_40 = arith.constant dense<0.000000e+00> : vector<8x32xf32>
    %53 = tpu.matmul %50, %52, %cst_40 {dimension_numbers = #tpu.dot_dimension_numbers<[1], [0], [0], [1], [0, 0, 1, 1], [], []>} : vector<8x32xf32>, vector<32x32xf32>, vector<8x32xf32> -> vector<8x32xf32>
    %c1_41 = arith.constant 1 : index
    %c0_42 = arith.constant 0 : index
    %c0_43 = arith.constant 0 : index
    %54 = vector.load %arg6[%c1_41, %c0_42, %c0_43] : memref<4x1x32xf32, #tpu.memory_space<vmem>>, vector<1x1x32xf32>
    %55 = vector.shape_cast %54 : vector<1x1x32xf32> to vector<1x32xf32>
    %56 = vector.broadcast %55 : vector<1x32xf32> to vector<8x32xf32>
    %57 = arith.addf %53, %56 : vector<8x32xf32>
    %cst_44 = arith.constant 0.000000e+00 : f32
    %58 = vector.broadcast %cst_44 : f32 to vector<8x32xf32>
    %59 = arith.cmpf oge, %57, %58 : vector<8x32xf32>
    %cst_45 = arith.constant 0.00999999977 : f32
    %60 = vector.broadcast %cst_45 : f32 to vector<8x32xf32>
    %61 = arith.mulf %60, %57 : vector<8x32xf32>
    %62 = arith.select %59, %57, %61 : vector<8x32xi1>, vector<8x32xf32>
    %c1_46 = arith.constant 1 : index
    %c0_47 = arith.constant 0 : index
    %c0_48 = arith.constant 0 : index
    %63 = vector.load %arg7[%c1_46, %c0_47, %c0_48] : memref<4x32x2xf32, #tpu.memory_space<vmem>>, vector<1x32x2xf32>
    %64 = vector.shape_cast %63 : vector<1x32x2xf32> to vector<32x2xf32>
    %cst_49 = arith.constant dense<0.000000e+00> : vector<8x2xf32>
    %65 = tpu.matmul %62, %64, %cst_49 {dimension_numbers = #tpu.dot_dimension_numbers<[1], [0], [0], [1], [0, 0, 1, 1], [], []>} : vector<8x32xf32>, vector<32x2xf32>, vector<8x2xf32> -> vector<8x2xf32>
    %c1_50 = arith.constant 1 : index
    %c0_51 = arith.constant 0 : index
    %c0_52 = arith.constant 0 : index
    %66 = vector.load %arg8[%c1_50, %c0_51, %c0_52] : memref<4x1x2xf32, #tpu.memory_space<vmem>>, vector<1x1x2xf32>
    %67 = vector.shape_cast %66 : vector<1x1x2xf32> to vector<1x2xf32>
    %68 = vector.broadcast %67 : vector<1x2xf32> to vector<8x2xf32>
    %69 = arith.addf %65, %68 : vector<8x2xf32>
    %cst_53 = arith.constant 0.000000e+00 : f32
    %70 = vector.broadcast %cst_53 : f32 to vector<8x2xf32>
    %71 = arith.cmpf oge, %69, %70 : vector<8x2xf32>
    %cst_54 = arith.constant 0.00999999977 : f32
    %72 = vector.broadcast %cst_54 : f32 to vector<8x2xf32>
    %73 = arith.mulf %72, %69 : vector<8x2xf32>
    %74 = arith.select %71, %69, %73 : vector<8x2xi1>, vector<8x2xf32>
    %75 = math.tanh %74 : vector<8x2xf32>
    %c2 = arith.constant 2 : index
    %c0_55 = arith.constant 0 : index
    %c0_56 = arith.constant 0 : index
    %76 = vector.load %arg3[%c2, %c0_55, %c0_56] : memref<4x8x32xf32, #tpu.memory_space<vmem>>, vector<1x8x32xf32>
    %77 = vector.shape_cast %76 : vector<1x8x32xf32> to vector<8x32xf32>
    %cst_57 = arith.constant dense<0.000000e+00> : vector<8x32xf32>
    %78 = tpu.matmul %1, %77, %cst_57 {dimension_numbers = #tpu.dot_dimension_numbers<[1], [0], [0], [1], [0, 0, 1, 1], [], []>} : vector<8x8xf32>, vector<8x32xf32>, vector<8x32xf32> -> vector<8x32xf32>
    %c2_58 = arith.constant 2 : index
    %c0_59 = arith.constant 0 : index
    %c0_60 = arith.constant 0 : index
    %79 = vector.load %arg4[%c2_58, %c0_59, %c0_60] : memref<4x1x32xf32, #tpu.memory_space<vmem>>, vector<1x1x32xf32>
    %80 = vector.shape_cast %79 : vector<1x1x32xf32> to vector<1x32xf32>
    %81 = vector.broadcast %80 : vector<1x32xf32> to vector<8x32xf32>
    %82 = arith.addf %78, %81 : vector<8x32xf32>
    %cst_61 = arith.constant 0.000000e+00 : f32
    %83 = vector.broadcast %cst_61 : f32 to vector<8x32xf32>
    %84 = arith.cmpf oge, %82, %83 : vector<8x32xf32>
    %cst_62 = arith.constant 0.00999999977 : f32
    %85 = vector.broadcast %cst_62 : f32 to vector<8x32xf32>
    %86 = arith.mulf %85, %82 : vector<8x32xf32>
    %87 = arith.select %84, %82, %86 : vector<8x32xi1>, vector<8x32xf32>
    %c2_63 = arith.constant 2 : index
    %c0_64 = arith.constant 0 : index
    %c0_65 = arith.constant 0 : index
    %88 = vector.load %arg5[%c2_63, %c0_64, %c0_65] : memref<4x32x32xf32, #tpu.memory_space<vmem>>, vector<1x32x32xf32>
    %89 = vector.shape_cast %88 : vector<1x32x32xf32> to vector<32x32xf32>
    %cst_66 = arith.constant dense<0.000000e+00> : vector<8x32xf32>
    %90 = tpu.matmul %87, %89, %cst_66 {dimension_numbers = #tpu.dot_dimension_numbers<[1], [0], [0], [1], [0, 0, 1, 1], [], []>} : vector<8x32xf32>, vector<32x32xf32>, vector<8x32xf32> -> vector<8x32xf32>
    %c2_67 = arith.constant 2 : index
    %c0_68 = arith.constant 0 : index
    %c0_69 = arith.constant 0 : index
    %91 = vector.load %arg6[%c2_67, %c0_68, %c0_69] : memref<4x1x32xf32, #tpu.memory_space<vmem>>, vector<1x1x32xf32>
    %92 = vector.shape_cast %91 : vector<1x1x32xf32> to vector<1x32xf32>
    %93 = vector.broadcast %92 : vector<1x32xf32> to vector<8x32xf32>
    %94 = arith.addf %90, %93 : vector<8x32xf32>
    %cst_70 = arith.constant 0.000000e+00 : f32
    %95 = vector.broadcast %cst_70 : f32 to vector<8x32xf32>
    %96 = arith.cmpf oge, %94, %95 : vector<8x32xf32>
    %cst_71 = arith.constant 0.00999999977 : f32
    %97 = vector.broadcast %cst_71 : f32 to vector<8x32xf32>
    %98 = arith.mulf %97, %94 : vector<8x32xf32>
    %99 = arith.select %96, %94, %98 : vector<8x32xi1>, vector<8x32xf32>
    %c2_72 = arith.constant 2 : index
    %c0_73 = arith.constant 0 : index
    %c0_74 = arith.constant 0 : index
    %100 = vector.load %arg7[%c2_72, %c0_73, %c0_74] : memref<4x32x2xf32, #tpu.memory_space<vmem>>, vector<1x32x2xf32>
    %101 = vector.shape_cast %100 : vector<1x32x2xf32> to vector<32x2xf32>
    %cst_75 = arith.constant dense<0.000000e+00> : vector<8x2xf32>
    %102 = tpu.matmul %99, %101, %cst_75 {dimension_numbers = #tpu.dot_dimension_numbers<[1], [0], [0], [1], [0, 0, 1, 1], [], []>} : vector<8x32xf32>, vector<32x2xf32>, vector<8x2xf32> -> vector<8x2xf32>
    %c2_76 = arith.constant 2 : index
    %c0_77 = arith.constant 0 : index
    %c0_78 = arith.constant 0 : index
    %103 = vector.load %arg8[%c2_76, %c0_77, %c0_78] : memref<4x1x2xf32, #tpu.memory_space<vmem>>, vector<1x1x2xf32>
    %104 = vector.shape_cast %103 : vector<1x1x2xf32> to vector<1x2xf32>
    %105 = vector.broadcast %104 : vector<1x2xf32> to vector<8x2xf32>
    %106 = arith.addf %102, %105 : vector<8x2xf32>
    %cst_79 = arith.constant 0.000000e+00 : f32
    %107 = vector.broadcast %cst_79 : f32 to vector<8x2xf32>
    %108 = arith.cmpf oge, %106, %107 : vector<8x2xf32>
    %cst_80 = arith.constant 0.00999999977 : f32
    %109 = vector.broadcast %cst_80 : f32 to vector<8x2xf32>
    %110 = arith.mulf %109, %106 : vector<8x2xf32>
    %111 = arith.select %108, %106, %110 : vector<8x2xi1>, vector<8x2xf32>
    %c3 = arith.constant 3 : index
    %c0_81 = arith.constant 0 : index
    %c0_82 = arith.constant 0 : index
    %112 = vector.load %arg3[%c3, %c0_81, %c0_82] : memref<4x8x32xf32, #tpu.memory_space<vmem>>, vector<1x8x32xf32>
    %113 = vector.shape_cast %112 : vector<1x8x32xf32> to vector<8x32xf32>
    %cst_83 = arith.constant dense<0.000000e+00> : vector<8x32xf32>
    %114 = tpu.matmul %1, %113, %cst_83 {dimension_numbers = #tpu.dot_dimension_numbers<[1], [0], [0], [1], [0, 0, 1, 1], [], []>} : vector<8x8xf32>, vector<8x32xf32>, vector<8x32xf32> -> vector<8x32xf32>
    %c3_84 = arith.constant 3 : index
    %c0_85 = arith.constant 0 : index
    %c0_86 = arith.constant 0 : index
    %115 = vector.load %arg4[%c3_84, %c0_85, %c0_86] : memref<4x1x32xf32, #tpu.memory_space<vmem>>, vector<1x1x32xf32>
    %116 = vector.shape_cast %115 : vector<1x1x32xf32> to vector<1x32xf32>
    %117 = vector.broadcast %116 : vector<1x32xf32> to vector<8x32xf32>
    %118 = arith.addf %114, %117 : vector<8x32xf32>
    %cst_87 = arith.constant 0.000000e+00 : f32
    %119 = vector.broadcast %cst_87 : f32 to vector<8x32xf32>
    %120 = arith.cmpf oge, %118, %119 : vector<8x32xf32>
    %cst_88 = arith.constant 0.00999999977 : f32
    %121 = vector.broadcast %cst_88 : f32 to vector<8x32xf32>
    %122 = arith.mulf %121, %118 : vector<8x32xf32>
    %123 = arith.select %120, %118, %122 : vector<8x32xi1>, vector<8x32xf32>
    %c3_89 = arith.constant 3 : index
    %c0_90 = arith.constant 0 : index
    %c0_91 = arith.constant 0 : index
    %124 = vector.load %arg5[%c3_89, %c0_90, %c0_91] : memref<4x32x32xf32, #tpu.memory_space<vmem>>, vector<1x32x32xf32>
    %125 = vector.shape_cast %124 : vector<1x32x32xf32> to vector<32x32xf32>
    %cst_92 = arith.constant dense<0.000000e+00> : vector<8x32xf32>
    %126 = tpu.matmul %123, %125, %cst_92 {dimension_numbers = #tpu.dot_dimension_numbers<[1], [0], [0], [1], [0, 0, 1, 1], [], []>} : vector<8x32xf32>, vector<32x32xf32>, vector<8x32xf32> -> vector<8x32xf32>
    %c3_93 = arith.constant 3 : index
    %c0_94 = arith.constant 0 : index
    %c0_95 = arith.constant 0 : index
    %127 = vector.load %arg6[%c3_93, %c0_94, %c0_95] : memref<4x1x32xf32, #tpu.memory_space<vmem>>, vector<1x1x32xf32>
    %128 = vector.shape_cast %127 : vector<1x1x32xf32> to vector<1x32xf32>
    %129 = vector.broadcast %128 : vector<1x32xf32> to vector<8x32xf32>
    %130 = arith.addf %126, %129 : vector<8x32xf32>
    %cst_96 = arith.constant 0.000000e+00 : f32
    %131 = vector.broadcast %cst_96 : f32 to vector<8x32xf32>
    %132 = arith.cmpf oge, %130, %131 : vector<8x32xf32>
    %cst_97 = arith.constant 0.00999999977 : f32
    %133 = vector.broadcast %cst_97 : f32 to vector<8x32xf32>
    %134 = arith.mulf %133, %130 : vector<8x32xf32>
    %135 = arith.select %132, %130, %134 : vector<8x32xi1>, vector<8x32xf32>
    %c3_98 = arith.constant 3 : index
    %c0_99 = arith.constant 0 : index
    %c0_100 = arith.constant 0 : index
    %136 = vector.load %arg7[%c3_98, %c0_99, %c0_100] : memref<4x32x2xf32, #tpu.memory_space<vmem>>, vector<1x32x2xf32>
    %137 = vector.shape_cast %136 : vector<1x32x2xf32> to vector<32x2xf32>
    %cst_101 = arith.constant dense<0.000000e+00> : vector<8x2xf32>
    %138 = tpu.matmul %135, %137, %cst_101 {dimension_numbers = #tpu.dot_dimension_numbers<[1], [0], [0], [1], [0, 0, 1, 1], [], []>} : vector<8x32xf32>, vector<32x2xf32>, vector<8x2xf32> -> vector<8x2xf32>
    %c3_102 = arith.constant 3 : index
    %c0_103 = arith.constant 0 : index
    %c0_104 = arith.constant 0 : index
    %139 = vector.load %arg8[%c3_102, %c0_103, %c0_104] : memref<4x1x2xf32, #tpu.memory_space<vmem>>, vector<1x1x2xf32>
    %140 = vector.shape_cast %139 : vector<1x1x2xf32> to vector<1x2xf32>
    %141 = vector.broadcast %140 : vector<1x2xf32> to vector<8x2xf32>
    %142 = arith.addf %138, %141 : vector<8x2xf32>
    %cst_105 = arith.constant 0.000000e+00 : f32
    %143 = vector.broadcast %cst_105 : f32 to vector<8x2xf32>
    %144 = arith.cmpf oge, %142, %143 : vector<8x2xf32>
    %cst_106 = arith.constant 0.00999999977 : f32
    %145 = vector.broadcast %cst_106 : f32 to vector<8x2xf32>
    %146 = arith.mulf %145, %142 : vector<8x2xf32>
    %147 = arith.select %144, %142, %146 : vector<8x2xi1>, vector<8x2xf32>
    %148 = vector.extract_strided_slice %0 {offsets = [0, 0], sizes = [8, 2], strides = [1, 1]} : vector<8x4xf32> to vector<8x2xf32>
    %149 = vector.extract_strided_slice %0 {offsets = [0, 2], sizes = [8, 2], strides = [1, 1]} : vector<8x4xf32> to vector<8x2xf32>
    %150 = math.exp %38 : vector<8x2xf32>
    %151 = arith.mulf %149, %150 : vector<8x2xf32>
    %152 = arith.addf %151, %111 : vector<8x2xf32>
    %153 = math.exp %75 : vector<8x2xf32>
    %154 = arith.mulf %148, %153 : vector<8x2xf32>
    %155 = arith.addf %154, %147 : vector<8x2xf32>
    %156 = tpu.concatenate %152, %155 in 1 : vector<8x2xf32>, vector<8x2xf32> -> vector<8x4xf32>
    %c0_107 = arith.constant 0 : index
    %c0_108 = arith.constant 0 : index
    %157 = vector.load %arg9[%c0_107, %c0_108] : memref<8x4xf32, #tpu.memory_space<vmem>>, vector<8x4xf32>
    tpu.vector_store %arg9[%c0_107, %c0_108], %156 {strides = array<i32>} : memref<8x4xf32, #tpu.memory_space<vmem>>, vector<8x4xf32>,
    %cst_109 = arith.constant dense<0.000000e+00> : vector<8xf32>
    %158 = vector.multi_reduction <add>, %38, %cst_109 [1] : vector<8x2xf32> to vector<8xf32>
    %159 = vector.shape_cast %158 : vector<8xf32> to vector<8x1xf32>
    %cst_110 = arith.constant dense<0.000000e+00> : vector<8xf32>
    %160 = vector.multi_reduction <add>, %75, %cst_110 [1] : vector<8x2xf32> to vector<8xf32>
    %161 = vector.shape_cast %160 : vector<8xf32> to vector<8x1xf32>
    %162 = arith.addf %159, %161 : vector<8x1xf32>
    %c0_111 = arith.constant 0 : index
    %c0_112 = arith.constant 0 : index
    %163 = vector.load %arg10[%c0_111, %c0_112] : memref<8x1xf32, #tpu.memory_space<vmem>>, vector<8x1xf32>
    tpu.vector_store %arg10[%c0_111, %c0_112], %162 {strides = array<i32>} : memref<8x1xf32, #tpu.memory_space<vmem>>, vector<8x1xf32>,
    return
  }
  func.func @transform_0(%arg0: i32) -> (i32, i32) {
    %c0_i32 = arith.constant 0 : i32
    %c0_i32_0 = arith.constant 0 : i32
    return %arg0, %c0_i32 : i32, i32
  }
  func.func @transform_1(%arg0: i32) -> (i32, i32) {
    %c0_i32 = arith.constant 0 : i32
    %c0_i32_0 = arith.constant 0 : i32
    return %arg0, %c0_i32 : i32, i32
  }
  func.func @transform_2(%arg0: i32) -> (i32, i32, i32) {
    %c0_i32 = arith.constant 0 : i32
    %c0_i32_0 = arith.constant 0 : i32
    %c0_i32_1 = arith.constant 0 : i32
    %c0_i32_2 = arith.constant 0 : i32
    return %c0_i32, %c0_i32_0, %c0_i32_1 : i32, i32, i32
  }
  func.func @transform_3(%arg0: i32) -> (i32, i32, i32) {
    %c0_i32 = arith.constant 0 : i32
    %c0_i32_0 = arith.constant 0 : i32
    %c0_i32_1 = arith.constant 0 : i32
    %c0_i32_2 = arith.constant 0 : i32
    return %c0_i32, %c0_i32_0, %c0_i32_1 : i32, i32, i32
  }
  func.func @transform_4(%arg0: i32) -> (i32, i32, i32) {
    %c0_i32 = arith.constant 0 : i32
    %c0_i32_0 = arith.constant 0 : i32
    %c0_i32_1 = arith.constant 0 : i32
    %c0_i32_2 = arith.constant 0 : i32
    return %c0_i32, %c0_i32_0, %c0_i32_1 : i32, i32, i32
  }
  func.func @transform_5(%arg0: i32) -> (i32, i32, i32) {
    %c0_i32 = arith.constant 0 : i32
    %c0_i32_0 = arith.constant 0 : i32
    %c0_i32_1 = arith.constant 0 : i32
    %c0_i32_2 = arith.constant 0 : i32
    return %c0_i32, %c0_i32_0, %c0_i32_1 : i32, i32, i32
  }
  func.func @transform_6(%arg0: i32) -> (i32, i32, i32) {
    %c0_i32 = arith.constant 0 : i32
    %c0_i32_0 = arith.constant 0 : i32
    %c0_i32_1 = arith.constant 0 : i32
    %c0_i32_2 = arith.constant 0 : i32
    return %c0_i32, %c0_i32_0, %c0_i32_1 : i32, i32, i32
  }
  func.func @transform_7(%arg0: i32) -> (i32, i32, i32) {
    %c0_i32 = arith.constant 0 : i32
    %c0_i32_0 = arith.constant 0 : i32
    %c0_i32_1 = arith.constant 0 : i32
    %c0_i32_2 = arith.constant 0 : i32
    return %c0_i32, %c0_i32_0, %c0_i32_1 : i32, i32, i32
  }
  func.func @transform_8(%arg0: i32) -> (i32, i32) {
    %c0_i32 = arith.constant 0 : i32
    %c0_i32_0 = arith.constant 0 : i32
    return %arg0, %c0_i32 : i32, i32
  }
  func.func @transform_9(%arg0: i32) -> (i32, i32) {
    %c0_i32 = arith.constant 0 : i32
    %c0_i32_0 = arith.constant 0 : i32
    return %arg0, %c0_i32 : i32, i32
  }
}

</mosaic_0001>

<llo_original>
// kernel: tpu_custom_call.1
$region0: #{tpu_custom_call.1}
  #allocation0 [shape = 'u32[]', space=smem, size = 0x4, offset = 0x4, fixed_abs, tag = 'smem constant byte address 0x4 - core index']
  #allocation1 [shape = 'u32[144,128]{1,0:T(1,128)}', space=vmem, size = 0x12000, scoped, tag = 'internal scratch']
  %s0 = inlined_call_operand.vmem [shape: f32[16,4], index: 0, kind: input, shape index: {}]
  %s1 = inlined_call_operand.vmem [shape: f32[16,8], index: 1, kind: input, shape index: {}]
  %s2 = inlined_call_operand.vmem [shape: f32[4,8,32], index: 2, kind: input, shape index: {}]
  %s3 = inlined_call_operand.vmem [shape: f32[4,1,32], index: 3, kind: input, shape index: {}]
  %s4 = inlined_call_operand.vmem [shape: f32[4,32,32], index: 4, kind: input, shape index: {}]
  %s5 = inlined_call_operand.vmem [shape: f32[4,1,32], index: 5, kind: input, shape index: {}]
  %s6 = inlined_call_operand.vmem [shape: f32[4,32,2], index: 6, kind: input, shape index: {}]
  %s7 = inlined_call_operand.vmem [shape: f32[4,1,2], index: 7, kind: input, shape index: {}]
  %s8 = inlined_call_operand.vmem [shape: f32[16,4], index: 8, kind: output, shape index: {0}]
  %s9 = inlined_call_operand.vmem [shape: f32[16,1], index: 9, kind: output, shape index: {1}]
  %10 = xla_tuple %s8, %s9
  %s11 = sld [smem:[#allocation0]]
  $region73: #{tpu_custom_call.1} parent=0
    _
  %s13 = ssub.s32 1, %s11
  %s14 = scalar_select 0, %s13, %s11
  loop: start=0, step=1, limit=4
  $region2: #{tpu_custom_call.1} parent=0 // loop_pre_header
    _
  $region3: #{tpu_custom_call.1} parent=0 // loop_header
    %s16 = sphi 0, %s20
    %p17 = scmp.ge.s32.totalorder %s16, 4
    %s26 = sphi 0, %s28
    %s29 = sphi 0, %s26
    %s30 = sphi 0, %s29
    %s46 = sphi 0, %s30
    %s52 = sphi 0, %s54
    %s55 = sphi 0, %s52
    %s56 = sphi 0, %s55
    %s72 = sphi 0, %s56
    %s76 = sphi 0, %s76
    %s78 = sphi 0, %s76
    %s79 = sphi 0, %s78
    %s93 = sphi 0, %s79
    %s97 = sphi 0, %s97
    %s99 = sphi 0, %s97
    %s100 = sphi 0, %s99
    %s114 = sphi 0, %s100
    %s118 = sphi 0, %s118
    %s120 = sphi 0, %s118
    %s121 = sphi 0, %s120
    %s135 = sphi 0, %s121
    %s139 = sphi 0, %s139
    %s141 = sphi 0, %s139
    %s142 = sphi 0, %s141
    %s156 = sphi 0, %s142
    %s160 = sphi 0, %s160
    %s162 = sphi 0, %s160
    %s163 = sphi 0, %s162
    %s177 = sphi 0, %s163
    %s181 = sphi 0, %s181
    %s183 = sphi 0, %s181
    %s184 = sphi 0, %s183
    %s198 = sphi 0, %s184
    %s204 = sphi 0, %s206
    %s207 = sphi 0, %s204
    %s208 = sphi 0, %s207
    %s224 = sphi 0, %s208
    %s230 = sphi 0, %s232
    %s233 = sphi 0, %s230
    %s234 = sphi 0, %s233
    %s250 = sphi 0, %s234
  $region4: #{tpu_custom_call.1} parent=0 // loop_header_branch
    %19 = sbr.rel (%p17) target = $region8
  $region5: #{tpu_custom_call.1} parent=0 // loop_body
    %s21 = ssub.s32 %s16, 1
    %s22 = ssub.s32 %s16, 2
    %s23 = sadd.s32 %s16, 1
    %s24 = ssub.s32 %s16, %s23
    %p25 = scmp.eq.s32.totalorder %s24, 0
    %s27 = sadd.s32 %s26, 1
    %s28 = scalar_select %p25, %s26, %s27
    %p31 = pneg %p25
    %p32 = scmp.eq.s32.totalorder %s16, 1
    %p33 = por %p31, %p32
    %p34 = scmp.ne.s32.totalorder %s26, %s29
    %p35 = scmp.eq.s32.totalorder %s16, 0
    %p36 = por %p34, %p35
    %p37 = scmp.ne.s32.totalorder %s26, %s29
    %p38 = scmp.eq.s32.totalorder %s21, 1
    %p39 = por %p37, %p38
    %p40 = scmp.ne.s32.totalorder %s29, %s30
    %p41 = scmp.eq.s32.totalorder %s21, 0
    %p42 = por %p40, %p41
    %p43 = scmp.ne.s32.totalorder %s29, %s30
    %p44 = scmp.eq.s32.totalorder %s22, 1
    %p45 = por %p43, %p44
    %p47 = scmp.ne.s32.totalorder %s30, %s46
    %p48 = scmp.eq.s32.totalorder %s22, 0
    %p49 = por %p47, %p48
    %s50 = ssub.s32 %s16, %s23
    %p51 = scmp.eq.s32.totalorder %s50, 0
    %s53 = sadd.s32 %s52, 1
    %s54 = scalar_select %p51, %s52, %s53
    %p57 = pneg %p51
    %p58 = scmp.eq.s32.totalorder %s16, 1
    %p59 = por %p57, %p58
    %p60 = scmp.ne.s32.totalorder %s52, %s55
    %p61 = scmp.eq.s32.totalorder %s16, 0
    %p62 = por %p60, %p61
    %p63 = scmp.ne.s32.totalorder %s52, %s55
    %p64 = scmp.eq.s32.totalorder %s21, 1
    %p65 = por %p63, %p64
    %p66 = scmp.ne.s32.totalorder %s55, %s56
    %p67 = scmp.eq.s32.totalorder %s21, 0
    %p68 = por %p66, %p67
    %p69 = scmp.ne.s32.totalorder %s55, %s56
    %p70 = scmp.eq.s32.totalorder %s22, 1
    %p71 = por %p69, %p70
    %p73 = scmp.ne.s32.totalorder %s56, %s72
    %p74 = scmp.eq.s32.totalorder %s22, 0
    %p75 = por %p73, %p74
    %s77 = sadd.s32 %s76, 1
    %p80 = scmp.eq.s32.totalorder %s16, 1
    %p81 = scmp.ne.s32.totalorder %s76, %s78
    %p82 = scmp.eq.s32.totalorder %s16, 0
    %p83 = por %p81, %p82
    %p84 = scmp.ne.s32.totalorder %s76, %s78
    %p85 = scmp.eq.s32.totalorder %s21, 1
    %p86 = por %p84, %p85
    %p87 = scmp.ne.s32.totalorder %s78, %s79
    %p88 = scmp.eq.s32.totalorder %s21, 0
    %p89 = por %p87, %p88
    %p90 = scmp.ne.s32.totalorder %s78, %s79
    %p91 = scmp.eq.s32.totalorder %s22, 1
    %p92 = por %p90, %p91
    %p94 = scmp.ne.s32.totalorder %s79, %s93
    %p95 = scmp.eq.s32.totalorder %s22, 0
    %p96 = por %p94, %p95
    %s98 = sadd.s32 %s97, 1
    %p101 = scmp.eq.s32.totalorder %s16, 1
    %p102 = scmp.ne.s32.totalorder %s97, %s99
    %p103 = scmp.eq.s32.totalorder %s16, 0
    %p104 = por %p102, %p103
    %p105 = scmp.ne.s32.totalorder %s97, %s99
    %p106 = scmp.eq.s32.totalorder %s21, 1
    %p107 = por %p105, %p106
    %p108 = scmp.ne.s32.totalorder %s99, %s100
    %p109 = scmp.eq.s32.totalorder %s21, 0
    %p110 = por %p108, %p109
    %p111 = scmp.ne.s32.totalorder %s99, %s100
    %p112 = scmp.eq.s32.totalorder %s22, 1
    %p113 = por %p111, %p112
    %p115 = scmp.ne.s32.totalorder %s100, %s114
    %p116 = scmp.eq.s32.totalorder %s22, 0
    %p117 = por %p115, %p116
    %s119 = sadd.s32 %s118, 1
    %p122 = scmp.eq.s32.totalorder %s16, 1
    %p123 = scmp.ne.s32.totalorder %s118, %s120
    %p124 = scmp.eq.s32.totalorder %s16, 0
    %p125 = por %p123, %p124
    %p126 = scmp.ne.s32.totalorder %s118, %s120
    %p127 = scmp.eq.s32.totalorder %s21, 1
    %p128 = por %p126, %p127
    %p129 = scmp.ne.s32.totalorder %s120, %s121
    %p130 = scmp.eq.s32.totalorder %s21, 0
    %p131 = por %p129, %p130
    %p132 = scmp.ne.s32.totalorder %s120, %s121
    %p133 = scmp.eq.s32.totalorder %s22, 1
    %p134 = por %p132, %p133
    %p136 = scmp.ne.s32.totalorder %s121, %s135
    %p137 = scmp.eq.s32.totalorder %s22, 0
    %p138 = por %p136, %p137
    %s140 = sadd.s32 %s139, 1
    %p143 = scmp.eq.s32.totalorder %s16, 1
    %p144 = scmp.ne.s32.totalorder %s139, %s141
    %p145 = scmp.eq.s32.totalorder %s16, 0
    %p146 = por %p144, %p145
    %p147 = scmp.ne.s32.totalorder %s139, %s141
    %p148 = scmp.eq.s32.totalorder %s21, 1
    %p149 = por %p147, %p148
    %p150 = scmp.ne.s32.totalorder %s141, %s142
    %p151 = scmp.eq.s32.totalorder %s21, 0
    %p152 = por %p150, %p151
    %p153 = scmp.ne.s32.totalorder %s141, %s142
    %p154 = scmp.eq.s32.totalorder %s22, 1
    %p155 = por %p153, %p154
    %p157 = scmp.ne.s32.totalorder %s142, %s156
    %p158 = scmp.eq.s32.totalorder %s22, 0
    %p159 = por %p157, %p158
    %s161 = sadd.s32 %s160, 1
    %p164 = scmp.eq.s32.totalorder %s16, 1
    %p165 = scmp.ne.s32.totalorder %s160, %s162
    %p166 = scmp.eq.s32.totalorder %s16, 0
    %p167 = por %p165, %p166
    %p168 = scmp.ne.s32.totalorder %s160, %s162
    %p169 = scmp.eq.s32.totalorder %s21, 1
    %p170 = por %p168, %p169
    %p171 = scmp.ne.s32.totalorder %s162, %s163
    %p172 = scmp.eq.s32.totalorder %s21, 0
    %p173 = por %p171, %p172
    %p174 = scmp.ne.s32.totalorder %s162, %s163
    %p175 = scmp.eq.s32.totalorder %s22, 1
    %p176 = por %p174, %p175
    %p178 = scmp.ne.s32.totalorder %s163, %s177
    %p179 = scmp.eq.s32.totalorder %s22, 0
    %p180 = por %p178, %p179
    %s182 = sadd.s32 %s181, 1
    %p185 = scmp.eq.s32.totalorder %s16, 1
    %p186 = scmp.ne.s32.totalorder %s181, %s183
    %p187 = scmp.eq.s32.totalorder %s16, 0
    %p188 = por %p186, %p187
    %p189 = scmp.ne.s32.totalorder %s181, %s183
    %p190 = scmp.eq.s32.totalorder %s21, 1
    %p191 = por %p189, %p190
    %p192 = scmp.ne.s32.totalorder %s183, %s184
    %p193 = scmp.eq.s32.totalorder %s21, 0
    %p194 = por %p192, %p193
    %p195 = scmp.ne.s32.totalorder %s183, %s184
    %p196 = scmp.eq.s32.totalorder %s22, 1
    %p197 = por %p195, %p196
    %p199 = scmp.ne.s32.totalorder %s184, %s198
    %p200 = scmp.eq.s32.totalorder %s22, 0
    %p201 = por %p199, %p200
    %s202 = ssub.s32 %s16, %s23
    %p203 = scmp.eq.s32.totalorder %s202, 0
    %s205 = sadd.s32 %s204, 1
    %s206 = scalar_select %p203, %s204, %s205
    %p209 = pneg %p203
    %p210 = scmp.eq.s32.totalorder %s16, 1
    %p211 = por %p209, %p210
    %p212 = scmp.ne.s32.totalorder %s204, %s207
    %p213 = scmp.eq.s32.totalorder %s16, 0
    %p214 = por %p212, %p213
    %p215 = scmp.ne.s32.totalorder %s204, %s207
    %p216 = scmp.eq.s32.totalorder %s21, 1
    %p217 = por %p215, %p216
    %p218 = scmp.ne.s32.totalorder %s207, %s208
    %p219 = scmp.eq.s32.totalorder %s21, 0
    %p220 = por %p218, %p219
    %p221 = scmp.ne.s32.totalorder %s207, %s208
    %p222 = scmp.eq.s32.totalorder %s22, 1
    %p223 = por %p221, %p222
    %p225 = scmp.ne.s32.totalorder %s208, %s224
    %p226 = scmp.eq.s32.totalorder %s22, 0
    %p227 = por %p225, %p226
    %s228 = ssub.s32 %s16, %s23
    %p229 = scmp.eq.s32.totalorder %s228, 0
    %s231 = sadd.s32 %s230, 1
    %s232 = scalar_select %p229, %s230, %s231
    %p235 = pneg %p229
    %p236 = scmp.eq.s32.totalorder %s16, 1
    %p237 = por %p235, %p236
    %p238 = scmp.ne.s32.totalorder %s230, %s233
    %p239 = scmp.eq.s32.totalorder %s16, 0
    %p240 = por %p238, %p239
    %p241 = scmp.ne.s32.totalorder %s230, %s233
    %p242 = scmp.eq.s32.totalorder %s21, 1
    %p243 = por %p241, %p242
    %p244 = scmp.ne.s32.totalorder %s233, %s234
    %p245 = scmp.eq.s32.totalorder %s21, 0
    %p246 = por %p244, %p245
    %p247 = scmp.ne.s32.totalorder %s233, %s234
    %p248 = scmp.eq.s32.totalorder %s22, 1
    %p249 = por %p247, %p248
    %p251 = scmp.ne.s32.totalorder %s234, %s250
    %p252 = scmp.eq.s32.totalorder %s22, 0
    %p253 = por %p251, %p252
    %p254 = scmp.le.s32.totalorder 1, %s16
    %p255 = scmp.lt.s32.totalorder %s16, 3
    %p256 = pnand %p254, %p255
    %p257 = pneg %p256
    // Predicated region
    $region9: #{tpu_custom_call.1} parent=5 // pred_check
      _
    $region10: #{tpu_custom_call.1} parent=5 // pred_check_branch
      %259 = sbr.rel (%p256) target = $region12
    $region11: #{tpu_custom_call.1} parent=5 // pred_region
      %s260 = ssub.s32 %s16, 1
      // Predicated region
      $region13: #{tpu_custom_call.1} parent=11 // pred_check
        %p261 = pneg %p89
      $region14: #{tpu_custom_call.1} parent=11 // pred_check_branch
        %263 = sbr.rel (%p261) target = $region16
      $region15: #{tpu_custom_call.1} parent=11 // pred_region
        _
      $region16: #{tpu_custom_call.1} parent=11 // pred_fallthru
        _
      // Predicated region
      $region17: #{tpu_custom_call.1} parent=11 // pred_check
        %p264 = pneg %p110
      $region18: #{tpu_custom_call.1} parent=11 // pred_check_branch
        %266 = sbr.rel (%p264) target = $region20
      $region19: #{tpu_custom_call.1} parent=11 // pred_region
        _
      $region20: #{tpu_custom_call.1} parent=11 // pred_fallthru
        _
      // Predicated region
      $region21: #{tpu_custom_call.1} parent=11 // pred_check
        %p267 = pneg %p131
      $region22: #{tpu_custom_call.1} parent=11 // pred_check_branch
        %269 = sbr.rel (%p267) target = $region24
      $region23: #{tpu_custom_call.1} parent=11 // pred_region
        _
      $region24: #{tpu_custom_call.1} parent=11 // pred_fallthru
        _
      // Predicated region
      $region25: #{tpu_custom_call.1} parent=11 // pred_check
        %p270 = pneg %p152
      $region26: #{tpu_custom_call.1} parent=11 // pred_check_branch
        %272 = sbr.rel (%p270) target = $region28
      $region27: #{tpu_custom_call.1} parent=11 // pred_region
        _
      $region28: #{tpu_custom_call.1} parent=11 // pred_fallthru
        _
      // Predicated region
      $region29: #{tpu_custom_call.1} parent=11 // pred_check
        %p273 = pneg %p173
      $region30: #{tpu_custom_call.1} parent=11 // pred_check_branch
        %275 = sbr.rel (%p273) target = $region32
      $region31: #{tpu_custom_call.1} parent=11 // pred_region
        _
      $region32: #{tpu_custom_call.1} parent=11 // pred_fallthru
        _
      // Predicated region
      $region33: #{tpu_custom_call.1} parent=11 // pred_check
        %p276 = pneg %p194
      $region34: #{tpu_custom_call.1} parent=11 // pred_check_branch
        %278 = sbr.rel (%p276) target = $region36
      $region35: #{tpu_custom_call.1} parent=11 // pred_region
        _
      $region36: #{tpu_custom_call.1} parent=11 // pred_fallthru
        _
    $region12: #{tpu_custom_call.1} parent=5 // pred_fallthru
      _
    %p279 = scmp.lt.s32.totalorder %s16, 2
    // Predicated region
    $region37: #{tpu_custom_call.1} parent=5 // pred_check
      %p280 = pneg %p279
    $region38: #{tpu_custom_call.1} parent=5 // pred_check_branch
      %282 = sbr.rel (%p280) target = $region40
    $region39: #{tpu_custom_call.1} parent=5 // pred_region
      // Predicated region
      $region41: #{tpu_custom_call.1} parent=39 // pred_check
        %p283 = pneg %p36
      $region42: #{tpu_custom_call.1} parent=39 // pred_check_branch
        %285 = sbr.rel (%p283) target = $region44
      $region43: #{tpu_custom_call.1} parent=39 // pred_region
        %p286 = scmp.lt.s32.totalorder %s16, 1
        %s287 = scalar_select %p286, %s16, 1
        %s288 = smul.addr %s287, 8
        %s289 = scalar_lea.vmem %s0, %s288
      $region44: #{tpu_custom_call.1} parent=39 // pred_fallthru
        _
      // Predicated region
      $region45: #{tpu_custom_call.1} parent=39 // pred_check
        %p290 = pneg %p62
      $region46: #{tpu_custom_call.1} parent=39 // pred_check_branch
        %292 = sbr.rel (%p290) target = $region48
      $region47: #{tpu_custom_call.1} parent=39 // pred_region
        %p293 = scmp.lt.s32.totalorder %s16, 1
        %s294 = scalar_select %p293, %s16, 1
        %s295 = smul.addr %s294, 8
        %s296 = scalar_lea.vmem %s1, %s295
      $region48: #{tpu_custom_call.1} parent=39 // pred_fallthru
        _
    $region40: #{tpu_custom_call.1} parent=5 // pred_fallthru
      _
    %p297 = scmp.le.s32.totalorder 1, %s16
    %p298 = scmp.lt.s32.totalorder %s16, 3
    %p299 = pnand %p297, %p298
    %p300 = pneg %p299
    // Predicated region
    $region49: #{tpu_custom_call.1} parent=5 // pred_check
      _
    $region50: #{tpu_custom_call.1} parent=5 // pred_check_branch
      %302 = sbr.rel (%p299) target = $region52
    $region51: #{tpu_custom_call.1} parent=5 // pred_region
      %s303 = ssub.s32 %s16, 1
      %p304 = scmp.lt.s32.totalorder %s21, 1
      %s305 = scalar_select %p304, %s21, 1
      %s306 = smul.addr %s305, 8
      %s307 = scalar_lea.vmem %s0, %s306
      %p308 = pneg %p42
      %p309 = pneg %p39
      %p310 = scmp.lt.s32.totalorder %s21, 1
      %s311 = scalar_select %p310, %s21, 1
      %s312 = smul.addr %s311, 8
      %s313 = scalar_lea.vmem %s1, %s312
      %p314 = pneg %p68
      %p315 = pneg %p65
      %p316 = pneg %p89
      %p317 = pneg %p86
      %p318 = pneg %p110
      %p319 = pneg %p107
      %p320 = pneg %p131
      %p321 = pneg %p128
      %p322 = pneg %p152
      %p323 = pneg %p149
      %p324 = pneg %p173
      %p325 = pneg %p170
      %p326 = pneg %p194
      %p327 = pneg %p191
      %p328 = pneg %p220
      %p329 = pneg %p217
      %p330 = scmp.lt.s32.totalorder %s21, 1
      %s331 = scalar_select %p330, %s21, 1
      %s332 = smul.addr %s331, 8
      %s333 = scalar_lea.vmem %s8, %s332
      %p334 = pneg %p246
      %p335 = pneg %p243
      %p336 = scmp.lt.s32.totalorder %s21, 1
      %s337 = scalar_select %p336, %s21, 1
      %s338 = smul.addr %s337, 8
      %s339 = scalar_lea.vmem %s9, %s338
      %p340 = scmp.lt.s32.totalorder %s21, 1
      %s341 = scalar_select %p340, %s21, 1
      %s342 = smul.addr %s341, 8
      %s343 = scalar_lea.vmem %s0, %s342
      %p344 = scmp.lt.s32.totalorder %s21, 1
      %s345 = scalar_select %p344, %s21, 1
      %s346 = smul.addr %s345, 8
      %s347 = scalar_lea.vmem %s1, %s346
      %p348 = scmp.lt.s32.totalorder %s21, 1
      %s349 = scalar_select %p348, %s21, 1
      %s350 = smul.addr %s349, 8
      %s351 = scalar_lea.vmem %s8, %s350
      %p352 = scmp.lt.s32.totalorder %s21, 1
      %s353 = scalar_select %p352, %s21, 1
      %s354 = smul.addr %s353, 8
      %s355 = scalar_lea.vmem %s9, %s354
      %v356 = vld [vmem:[%s343] sm:$0xff]
      %v357 = vld [vmem:[%s347] sm:$0xff]
      %v358 = vld [vmem:[%s2] sm:$0xff]
      %v359 = vld [vmem:[%s3] sm:$0x1]
      %v361 = vlaneseq
      %v362 = vshrl.u32 %v361, 7
      %v363 = vsub.s32 0, %v362
      %v364 = vrot.slane %v359, %v363
      %vm366 = vcmask 64512
      %v368 = vsel %vm366, %v357, 0
      %370 = vmatprep.subr.mxu0 0.0
      %371 = vmatpush1.msra.mxu0 %v358
      %372 = vmatprep.subr.mxu0 0.0
      %373 = vmatpush1.msra.mxu0 0.0
      %374 = vmatprep.subr.mxu0 0.0
      %375 = vmatpush1.msra.mxu0 0.0
      %376 = vmatprep.subr.mxu0 0.0
      %377 = vmatpush1.msra.mxu0 0.0
      %378 = vmatprep.subr.mxu0 0.0
      %379 = vmatpush1.msra.mxu0 0.0
      %380 = vmatprep.subr.mxu0 0.0
      %381 = vmatpush1.msra.mxu0 0.0
      %382 = vmatprep.subr.mxu0 0.0
      %383 = vmatpush1.msra.mxu0 0.0
      %384 = vmatprep.subr.mxu0 0.0
      %385 = vmatpush1.msra.mxu0 0.0
      %386 = vmatprep.subr.mxu0 0.0
      %387 = vmatpush1.msra.mxu0 0.0
      %388 = vmatprep.subr.mxu0 0.0
      %389 = vmatpush1.msra.mxu0 0.0
      %390 = vmatprep.subr.mxu0 0.0
      %391 = vmatpush1.msra.mxu0 0.0
      %392 = vmatprep.subr.mxu0 0.0
      %393 = vmatpush1.msra.mxu0 0.0
      %394 = vmatprep.subr.mxu0 0.0
      %395 = vmatpush1.msra.mxu0 0.0
      %396 = vmatprep.subr.mxu0 0.0
      %397 = vmatpush1.msra.mxu0 0.0
      %398 = vmatprep.subr.mxu0 0.0
      %399 = vmatpush1.msra.mxu0 0.0
      %400 = vmatprep.subr.mxu0 0.0
      %401 = vmatpush1.msra.mxu0 0.0
      %402 = vmatprep.subr.mxu0 0.0
      %403 = vmatpush1.msra.mxu0 0.0
      %404 = vmatprep.subr.mxu0 0.0
      %405 = vmatpush1.msra.mxu0 0.0
      %406 = vmatprep.subr.mxu0 0.0
      %407 = vmatpush1.msra.mxu0 0.0
      %408 = vmatprep.subr.mxu0 0.0
      %409 = vmatpush1.msra.mxu0 0.0
      %410 = vmatprep.subr.mxu0 0.0
      %411 = vmatpush1.msra.mxu0 0.0
      %412 = vmatprep.subr.mxu0 0.0
      %413 = vmatpush1.msra.mxu0 0.0
      %414 = vmatprep.subr.mxu0 0.0
      %415 = vmatpush1.msra.mxu0 0.0
      %416 = vmatprep.subr.mxu0 0.0
      %417 = vmatpush1.msra.mxu0 0.0
      %418 = vmatprep.subr.mxu0 0.0
      %419 = vmatpush1.msra.mxu0 0.0
      %420 = vmatprep.subr.mxu0 0.0
      %421 = vmatpush1.msra.mxu0 0.0
      %422 = vmatprep.subr.mxu0 0.0
      %423 = vmatpush1.msra.mxu0 0.0
      %424 = vmatprep.subr.mxu0 0.0
      %425 = vmatpush1.msra.mxu0 0.0
      %426 = vmatprep.subr.mxu0 0.0
      %427 = vmatpush1.msra.mxu0 0.0
      %428 = vmatprep.subr.mxu0 0.0
      %429 = vmatpush1.msra.mxu0 0.0
      %430 = vmatprep.subr.mxu0 0.0
      %431 = vmatpush1.msra.mxu0 0.0
      %432 = vmatprep.subr.mxu0 0.0
      %433 = vmatpush1.msra.mxu0 0.0
      %434 = vmatprep.mubr.f32.mxu0 0.0
      %435 = vmatmul.mubr.f32.gmra.mrb[0].mxu0 %v368
      %v436 = vpop.f32.mrb[0].mxu0
      %v437 = vadd.f32 %v364, %v436
      %v438 = vpop.f32.mrb[0].mxu0
      %439 = vdwg.mxu0
      %vm440 = vcmp.ge.f32.partialorder %v437, 0.0
      %v441 = vmul.f32 %v437, 0.01
      %v442 = vsel %vm440, %v437, %v441
      %v443 = vld [vmem:[%s4] sm:$0xff]
      %v444 = vld [vmem:[%s4 + $0x8] sm:$0xff]
      %v445 = vld [vmem:[%s4 + $0x10] sm:$0xff]
      %v446 = vld [vmem:[%s4 + $0x18] sm:$0xff]
      %v447 = vld [vmem:[%s5] sm:$0x1]
      %v449 = vlaneseq
      %v450 = vshrl.u32 %v449, 7
      %v451 = vsub.s32 0, %v450
      %v452 = vrot.slane %v447, %v451
      %vm454 = vcmask 261120
      %v456 = vsel %vm454, %v442, 0
      %458 = vmatprep.subr.mxu0 0.0
      %459 = vmatpush1.msra.mxu0 %v443
      %460 = vmatprep.subr.mxu0 0.0
      %461 = vmatpush1.msra.mxu0 %v444
      %462 = vmatprep.subr.mxu0 0.0
      %463 = vmatpush1.msra.mxu0 %v445
      %464 = vmatprep.subr.mxu0 0.0
      %465 = vmatpush1.msra.mxu0 %v446
      %466 = vmatprep.subr.mxu0 0.0
      %467 = vmatpush1.msra.mxu0 0.0
      %468 = vmatprep.subr.mxu0 0.0
      %469 = vmatpush1.msra.mxu0 0.0
      %470 = vmatprep.subr.mxu0 0.0
      %471 = vmatpush1.msra.mxu0 0.0
      %472 = vmatprep.subr.mxu0 0.0
      %473 = vmatpush1.msra.mxu0 0.0
      %474 = vmatprep.subr.mxu0 0.0
      %475 = vmatpush1.msra.mxu0 0.0
      %476 = vmatprep.subr.mxu0 0.0
      %477 = vmatpush1.msra.mxu0 0.0
      %478 = vmatprep.subr.mxu0 0.0
      %479 = vmatpush1.msra.mxu0 0.0
      %480 = vmatprep.subr.mxu0 0.0
      %481 = vmatpush1.msra.mxu0 0.0
      %482 = vmatprep.subr.mxu0 0.0
      %483 = vmatpush1.msra.mxu0 0.0
      %484 = vmatprep.subr.mxu0 0.0
      %485 = vmatpush1.msra.mxu0 0.0
      %486 = vmatprep.subr.mxu0 0.0
      %487 = vmatpush1.msra.mxu0 0.0
      %488 = vmatprep.subr.mxu0 0.0
      %489 = vmatpush1.msra.mxu0 0.0
      %490 = vmatprep.subr.mxu0 0.0
      %491 = vmatpush1.msra.mxu0 0.0
      %492 = vmatprep.subr.mxu0 0.0
      %493 = vmatpush1.msra.mxu0 0.0
      %494 = vmatprep.subr.mxu0 0.0
      %495 = vmatpush1.msra.mxu0 0.0
      %496 = vmatprep.subr.mxu0 0.0
      %497 = vmatpush1.msra.mxu0 0.0
      %498 = vmatprep.subr.mxu0 0.0
      %499 = vmatpush1.msra.mxu0 0.0
      %500 = vmatprep.subr.mxu0 0.0
      %501 = vmatpush1.msra.mxu0 0.0
      %502 = vmatprep.subr.mxu0 0.0
      %503 = vmatpush1.msra.mxu0 0.0
      %504 = vmatprep.subr.mxu0 0.0
      %505 = vmatpush1.msra.mxu0 0.0
      %506 = vmatprep.subr.mxu0 0.0
      %507 = vmatpush1.msra.mxu0 0.0
      %508 = vmatprep.subr.mxu0 0.0
      %509 = vmatpush1.msra.mxu0 0.0
      %510 = vmatprep.subr.mxu0 0.0
      %511 = vmatpush1.msra.mxu0 0.0
      %512 = vmatprep.subr.mxu0 0.0
      %513 = vmatpush1.msra.mxu0 0.0
      %514 = vmatprep.subr.mxu0 0.0
      %515 = vmatpush1.msra.mxu0 0.0
      %516 = vmatprep.subr.mxu0 0.0
      %517 = vmatpush1.msra.mxu0 0.0
      %518 = vmatprep.subr.mxu0 0.0
      %519 = vmatpush1.msra.mxu0 0.0
      %520 = vmatprep.subr.mxu0 0.0
      %521 = vmatpush1.msra.mxu0 0.0
      %522 = vmatprep.mubr.f32.mxu0 0.0
      %523 = vmatmul.mubr.f32.gmra.mrb[0].mxu0 %v456
      %v524 = vpop.f32.mrb[0].mxu0
      %v525 = vadd.f32 %v452, %v524
      %v526 = vpop.f32.mrb[0].mxu0
      %527 = vdwg.mxu0
      %vm528 = vcmp.ge.f32.partialorder %v525, 0.0
      %v529 = vmul.f32 %v525, 0.01
      %v530 = vsel %vm528, %v525, %v529
      %v531 = vld [vmem:[%s6] sm:$0xff]
      %v532 = vld [vmem:[%s6 + $0x8] sm:$0xff]
      %v533 = vld [vmem:[%s6 + $0x10] sm:$0xff]
      %v534 = vld [vmem:[%s6 + $0x18] sm:$0xff]
      %v535 = vld [vmem:[%s7] sm:$0x1]
      %v537 = vlaneseq
      %v538 = vshrl.u32 %v537, 7
      %v539 = vsub.s32 0, %v538
      %v540 = vrot.slane %v535, %v539
      %v543 = vsel %vm454, %v530, 0
      %545 = vmatprep.subr.mxu0 0.0
      %546 = vmatpush1.msra.mxu0 %v531
      %547 = vmatprep.subr.mxu0 0.0
      %548 = vmatpush1.msra.mxu0 %v532
      %549 = vmatprep.subr.mxu0 0.0
      %550 = vmatpush1.msra.mxu0 %v533
      %551 = vmatprep.subr.mxu0 0.0
      %552 = vmatpush1.msra.mxu0 %v534
      %553 = vmatprep.subr.mxu0 0.0
      %554 = vmatpush1.msra.mxu0 0.0
      %555 = vmatprep.subr.mxu0 0.0
      %556 = vmatpush1.msra.mxu0 0.0
      %557 = vmatprep.subr.mxu0 0.0
      %558 = vmatpush1.msra.mxu0 0.0
      %559 = vmatprep.subr.mxu0 0.0
      %560 = vmatpush1.msra.mxu0 0.0
      %561 = vmatprep.subr.mxu0 0.0
      %562 = vmatpush1.msra.mxu0 0.0
      %563 = vmatprep.subr.mxu0 0.0
      %564 = vmatpush1.msra.mxu0 0.0
      %565 = vmatprep.subr.mxu0 0.0
      %566 = vmatpush1.msra.mxu0 0.0
      %567 = vmatprep.subr.mxu0 0.0
      %568 = vmatpush1.msra.mxu0 0.0
      %569 = vmatprep.subr.mxu0 0.0
      %570 = vmatpush1.msra.mxu0 0.0
      %571 = vmatprep.subr.mxu0 0.0
      %572 = vmatpush1.msra.mxu0 0.0
      %573 = vmatprep.subr.mxu0 0.0
      %574 = vmatpush1.msra.mxu0 0.0
      %575 = vmatprep.subr.mxu0 0.0
      %576 = vmatpush1.msra.mxu0 0.0
      %577 = vmatprep.subr.mxu0 0.0
      %578 = vmatpush1.msra.mxu0 0.0
      %579 = vmatprep.subr.mxu0 0.0
      %580 = vmatpush1.msra.mxu0 0.0
      %581 = vmatprep.subr.mxu0 0.0
      %582 = vmatpush1.msra.mxu0 0.0
      %583 = vmatprep.subr.mxu0 0.0
      %584 = vmatpush1.msra.mxu0 0.0
      %585 = vmatprep.subr.mxu0 0.0
      %586 = vmatpush1.msra.mxu0 0.0
      %587 = vmatprep.subr.mxu0 0.0
      %588 = vmatpush1.msra.mxu0 0.0
      %589 = vmatprep.subr.mxu0 0.0
      %590 = vmatpush1.msra.mxu0 0.0
      %591 = vmatprep.subr.mxu0 0.0
      %592 = vmatpush1.msra.mxu0 0.0
      %593 = vmatprep.subr.mxu0 0.0
      %594 = vmatpush1.msra.mxu0 0.0
      %595 = vmatprep.subr.mxu0 0.0
      %596 = vmatpush1.msra.mxu0 0.0
      %597 = vmatprep.subr.mxu0 0.0
      %598 = vmatpush1.msra.mxu0 0.0
      %599 = vmatprep.subr.mxu0 0.0
      %600 = vmatpush1.msra.mxu0 0.0
      %601 = vmatprep.subr.mxu0 0.0
      %602 = vmatpush1.msra.mxu0 0.0
      %603 = vmatprep.subr.mxu0 0.0
      %604 = vmatpush1.msra.mxu0 0.0
      %605 = vmatprep.subr.mxu0 0.0
      %606 = vmatpush1.msra.mxu0 0.0
      %607 = vmatprep.subr.mxu0 0.0
      %608 = vmatpush1.msra.mxu0 0.0
      %609 = vmatprep.mubr.f32.mxu0 0.0
      %610 = vmatmul.mubr.f32.gmra.mrb[0].mxu0 %v543
      %v611 = vpop.f32.mrb[0].mxu0
      %v612 = vadd.f32 %v540, %v611
      %v613 = vpop.f32.mrb[0].mxu0
      %614 = vdwg.mxu0
      %vm615 = vcmp.ge.f32.partialorder %v612, 0.0
      %v616 = vmul.f32 %v612, 0.01
      %v617 = vsel %vm615, %v612, %v616
      %v618 = vtanh.pop %v617
      %s619 = scalar_lea.vmem %s2, 8
      %v620 = vld [vmem:[%s619] sm:$0xff]
      %s621 = scalar_lea.vmem %s3, 1
      %v622 = vld [vmem:[%s621] sm:$0x1]
      %v624 = vlaneseq
      %v625 = vshrl.u32 %v624, 7
      %v626 = vsub.s32 0, %v625
      %v627 = vrot.slane %v622, %v626
      %629 = vmatprep.subr.mxu0 0.0
      %630 = vmatpush1.msra.mxu0 %v620
      %631 = vmatprep.subr.mxu0 0.0
      %632 = vmatpush1.msra.mxu0 0.0
      %633 = vmatprep.subr.mxu0 0.0
      %634 = vmatpush1.msra.mxu0 0.0
      %635 = vmatprep.subr.mxu0 0.0
      %636 = vmatpush1.msra.mxu0 0.0
      %637 = vmatprep.subr.mxu0 0.0
      %638 = vmatpush1.msra.mxu0 0.0
      %639 = vmatprep.subr.mxu0 0.0
      %640 = vmatpush1.msra.mxu0 0.0
      %641 = vmatprep.subr.mxu0 0.0
      %642 = vmatpush1.msra.mxu0 0.0
      %643 = vmatprep.subr.mxu0 0.0
      %644 = vmatpush1.msra.mxu0 0.0
      %645 = vmatprep.subr.mxu0 0.0
      %646 = vmatpush1.msra.mxu0 0.0
      %647 = vmatprep.subr.mxu0 0.0
      %648 = vmatpush1.msra.mxu0 0.0
      %649 = vmatprep.subr.mxu0 0.0
      %650 = vmatpush1.msra.mxu0 0.0
      %651 = vmatprep.subr.mxu0 0.0
      %652 = vmatpush1.msra.mxu0 0.0
      %653 = vmatprep.subr.mxu0 0.0
      %654 = vmatpush1.msra.mxu0 0.0
      %655 = vmatprep.subr.mxu0 0.0
      %656 = vmatpush1.msra.mxu0 0.0
      %657 = vmatprep.subr.mxu0 0.0
      %658 = vmatpush1.msra.mxu0 0.0
      %659 = vmatprep.subr.mxu0 0.0
      %660 = vmatpush1.msra.mxu0 0.0
      %661 = vmatprep.subr.mxu0 0.0
      %662 = vmatpush1.msra.mxu0 0.0
      %663 = vmatprep.subr.mxu0 0.0
      %664 = vmatpush1.msra.mxu0 0.0
      %665 = vmatprep.subr.mxu0 0.0
      %666 = vmatpush1.msra.mxu0 0.0
      %667 = vmatprep.subr.mxu0 0.0
      %668 = vmatpush1.msra.mxu0 0.0
      %669 = vmatprep.subr.mxu0 0.0
      %670 = vmatpush1.msra.mxu0 0.0
      %671 = vmatprep.subr.mxu0 0.0
      %672 = vmatpush1.msra.mxu0 0.0
      %673 = vmatprep.subr.mxu0 0.0
      %674 = vmatpush1.msra.mxu0 0.0
      %675 = vmatprep.subr.mxu0 0.0
      %676 = vmatpush1.msra.mxu0 0.0
      %677 = vmatprep.subr.mxu0 0.0
      %678 = vmatpush1.msra.mxu0 0.0
      %679 = vmatprep.subr.mxu0 0.0
      %680 = vmatpush1.msra.mxu0 0.0
      %681 = vmatprep.subr.mxu0 0.0
      %682 = vmatpush1.msra.mxu0 0.0
      %683 = vmatprep.subr.mxu0 0.0
      %684 = vmatpush1.msra.mxu0 0.0
      %685 = vmatprep.subr.mxu0 0.0
      %686 = vmatpush1.msra.mxu0 0.0
      %687 = vmatprep.subr.mxu0 0.0
      %688 = vmatpush1.msra.mxu0 0.0
      %689 = vmatprep.subr.mxu0 0.0
      %690 = vmatpush1.msra.mxu0 0.0
      %691 = vmatprep.subr.mxu0 0.0
      %692 = vmatpush1.msra.mxu0 0.0
      %693 = vmatprep.mubr.f32.mxu0 0.0
      %694 = vmatmul.mubr.f32.gmra.mrb[0].mxu0 %v368
      %v695 = vpop.f32.mrb[0].mxu0
      %v696 = vadd.f32 %v627, %v695
      %v697 = vpop.f32.mrb[0].mxu0
      %698 = vdwg.mxu0
      %vm699 = vcmp.ge.f32.partialorder %v696, 0.0
      %v700 = vmul.f32 %v696, 0.01
      %v701 = vsel %vm699, %v696, %v700
      %s702 = scalar_lea.vmem %s4, 32
      %v703 = vld [vmem:[%s702] sm:$0xff]
      %v704 = vld [vmem:[%s702 + $0x8] sm:$0xff]
      %v705 = vld [vmem:[%s702 + $0x10] sm:$0xff]
      %v706 = vld [vmem:[%s702 + $0x18] sm:$0xff]
      %s707 = scalar_lea.vmem %s5, 1
      %v708 = vld [vmem:[%s707] sm:$0x1]
      %v710 = vlaneseq
      %v711 = vshrl.u32 %v710, 7
      %v712 = vsub.s32 0, %v711
      %v713 = vrot.slane %v708, %v712
      %v716 = vsel %vm454, %v701, 0
      %718 = vmatprep.subr.mxu0 0.0
      %719 = vmatpush1.msra.mxu0 %v703
      %720 = vmatprep.subr.mxu0 0.0
      %721 = vmatpush1.msra.mxu0 %v704
      %722 = vmatprep.subr.mxu0 0.0
      %723 = vmatpush1.msra.mxu0 %v705
      %724 = vmatprep.subr.mxu0 0.0
      %725 = vmatpush1.msra.mxu0 %v706
      %726 = vmatprep.subr.mxu0 0.0
      %727 = vmatpush1.msra.mxu0 0.0
      %728 = vmatprep.subr.mxu0 0.0
      %729 = vmatpush1.msra.mxu0 0.0
      %730 = vmatprep.subr.mxu0 0.0
      %731 = vmatpush1.msra.mxu0 0.0
      %732 = vmatprep.subr.mxu0 0.0
      %733 = vmatpush1.msra.mxu0 0.0
      %734 = vmatprep.subr.mxu0 0.0
      %735 = vmatpush1.msra.mxu0 0.0
      %736 = vmatprep.subr.mxu0 0.0
      %737 = vmatpush1.msra.mxu0 0.0
      %738 = vmatprep.subr.mxu0 0.0
      %739 = vmatpush1.msra.mxu0 0.0
      %740 = vmatprep.subr.mxu0 0.0
      %741 = vmatpush1.msra.mxu0 0.0
      %742 = vmatprep.subr.mxu0 0.0
      %743 = vmatpush1.msra.mxu0 0.0
      %744 = vmatprep.subr.mxu0 0.0
      %745 = vmatpush1.msra.mxu0 0.0
      %746 = vmatprep.subr.mxu0 0.0
      %747 = vmatpush1.msra.mxu0 0.0
      %748 = vmatprep.subr.mxu0 0.0
      %749 = vmatpush1.msra.mxu0 0.0
      %750 = vmatprep.subr.mxu0 0.0
      %751 = vmatpush1.msra.mxu0 0.0
      %752 = vmatprep.subr.mxu0 0.0
      %753 = vmatpush1.msra.mxu0 0.0
      %754 = vmatprep.subr.mxu0 0.0
      %755 = vmatpush1.msra.mxu0 0.0
      %756 = vmatprep.subr.mxu0 0.0
      %757 = vmatpush1.msra.mxu0 0.0
      %758 = vmatprep.subr.mxu0 0.0
      %759 = vmatpush1.msra.mxu0 0.0
      %760 = vmatprep.subr.mxu0 0.0
      %761 = vmatpush1.msra.mxu0 0.0
      %762 = vmatprep.subr.mxu0 0.0
      %763 = vmatpush1.msra.mxu0 0.0
      %764 = vmatprep.subr.mxu0 0.0
      %765 = vmatpush1.msra.mxu0 0.0
      %766 = vmatprep.subr.mxu0 0.0
      %767 = vmatpush1.msra.mxu0 0.0
      %768 = vmatprep.subr.mxu0 0.0
      %769 = vmatpush1.msra.mxu0 0.0
      %770 = vmatprep.subr.mxu0 0.0
      %771 = vmatpush1.msra.mxu0 0.0
      %772 = vmatprep.subr.mxu0 0.0
      %773 = vmatpush1.msra.mxu0 0.0
      %774 = vmatprep.subr.mxu0 0.0
      %775 = vmatpush1.msra.mxu0 0.0
      %776 = vmatprep.subr.mxu0 0.0
      %777 = vmatpush1.msra.mxu0 0.0
      %778 = vmatprep.subr.mxu0 0.0
      %779 = vmatpush1.msra.mxu0 0.0
      %780 = vmatprep.subr.mxu0 0.0
      %781 = vmatpush1.msra.mxu0 0.0
      %782 = vmatprep.mubr.f32.mxu0 0.0
      %783 = vmatmul.mubr.f32.gmra.mrb[0].mxu0 %v716
      %v784 = vpop.f32.mrb[0].mxu0
      %v785 = vadd.f32 %v713, %v784
      %v786 = vpop.f32.mrb[0].mxu0
      %787 = vdwg.mxu0
      %vm788 = vcmp.ge.f32.partialorder %v785, 0.0
      %v789 = vmul.f32 %v785, 0.01
      %v790 = vsel %vm788, %v785, %v789
      %s791 = scalar_lea.vmem %s6, 32
      %v792 = vld [vmem:[%s791] sm:$0xff]
      %v793 = vld [vmem:[%s791 + $0x8] sm:$0xff]
      %v794 = vld [vmem:[%s791 + $0x10] sm:$0xff]
      %v795 = vld [vmem:[%s791 + $0x18] sm:$0xff]
      %s796 = scalar_lea.vmem %s7, 1
      %v797 = vld [vmem:[%s796] sm:$0x1]
      %v799 = vlaneseq
      %v800 = vshrl.u32 %v799, 7
      %v801 = vsub.s32 0, %v800
      %v802 = vrot.slane %v797, %v801
      %v805 = vsel %vm454, %v790, 0
      %807 = vmatprep.subr.mxu0 0.0
      %808 = vmatpush1.msra.mxu0 %v792
      %809 = vmatprep.subr.mxu0 0.0
      %810 = vmatpush1.msra.mxu0 %v793
      %811 = vmatprep.subr.mxu0 0.0
      %812 = vmatpush1.msra.mxu0 %v794
      %813 = vmatprep.subr.mxu0 0.0
      %814 = vmatpush1.msra.mxu0 %v795
      %815 = vmatprep.subr.mxu0 0.0
      %816 = vmatpush1.msra.mxu0 0.0
      %817 = vmatprep.subr.mxu0 0.0
      %818 = vmatpush1.msra.mxu0 0.0
      %819 = vmatprep.subr.mxu0 0.0
      %820 = vmatpush1.msra.mxu0 0.0
      %821 = vmatprep.subr.mxu0 0.0
      %822 = vmatpush1.msra.mxu0 0.0
      %823 = vmatprep.subr.mxu0 0.0
      %824 = vmatpush1.msra.mxu0 0.0
      %825 = vmatprep.subr.mxu0 0.0
      %826 = vmatpush1.msra.mxu0 0.0
      %827 = vmatprep.subr.mxu0 0.0
      %828 = vmatpush1.msra.mxu0 0.0
      %829 = vmatprep.subr.mxu0 0.0
      %830 = vmatpush1.msra.mxu0 0.0
      %831 = vmatprep.subr.mxu0 0.0
      %832 = vmatpush1.msra.mxu0 0.0
      %833 = vmatprep.subr.mxu0 0.0
      %834 = vmatpush1.msra.mxu0 0.0
      %835 = vmatprep.subr.mxu0 0.0
      %836 = vmatpush1.msra.mxu0 0.0
      %837 = vmatprep.subr.mxu0 0.0
      %838 = vmatpush1.msra.mxu0 0.0
      %839 = vmatprep.subr.mxu0 0.0
      %840 = vmatpush1.msra.mxu0 0.0
      %841 = vmatprep.subr.mxu0 0.0
      %842 = vmatpush1.msra.mxu0 0.0
      %843 = vmatprep.subr.mxu0 0.0
      %844 = vmatpush1.msra.mxu0 0.0
      %845 = vmatprep.subr.mxu0 0.0
      %846 = vmatpush1.msra.mxu0 0.0
      %847 = vmatprep.subr.mxu0 0.0
      %848 = vmatpush1.msra.mxu0 0.0
      %849 = vmatprep.subr.mxu0 0.0
      %850 = vmatpush1.msra.mxu0 0.0
      %851 = vmatprep.subr.mxu0 0.0
      %852 = vmatpush1.msra.mxu0 0.0
      %853 = vmatprep.subr.mxu0 0.0
      %854 = vmatpush1.msra.mxu0 0.0
      %855 = vmatprep.subr.mxu0 0.0
      %856 = vmatpush1.msra.mxu0 0.0
      %857 = vmatprep.subr.mxu0 0.0
      %858 = vmatpush1.msra.mxu0 0.0
      %859 = vmatprep.subr.mxu0 0.0
      %860 = vmatpush1.msra.mxu0 0.0
      %861 = vmatprep.subr.mxu0 0.0
      %862 = vmatpush1.msra.mxu0 0.0
      %863 = vmatprep.subr.mxu0 0.0
      %864 = vmatpush1.msra.mxu0 0.0
      %865 = vmatprep.subr.mxu0 0.0
      %866 = vmatpush1.msra.mxu0 0.0
      %867 = vmatprep.subr.mxu0 0.0
      %868 = vmatpush1.msra.mxu0 0.0
      %869 = vmatprep.subr.mxu0 0.0
      %870 = vmatpush1.msra.mxu0 0.0
      %871 = vmatprep.mubr.f32.mxu0 0.0
      %872 = vmatmul.mubr.f32.gmra.mrb[0].mxu0 %v805
      %v873 = vpop.f32.mrb[0].mxu0
      %v874 = vadd.f32 %v802, %v873
      %v875 = vpop.f32.mrb[0].mxu0
      %876 = vdwg.mxu0
      %vm877 = vcmp.ge.f32.partialorder %v874, 0.0
      %v878 = vmul.f32 %v874, 0.01
      %v879 = vsel %vm877, %v874, %v878
      %v880 = vtanh.pop %v879
      %s881 = scalar_lea.vmem %s2, 16
      %v882 = vld [vmem:[%s881] sm:$0xff]
      %s883 = scalar_lea.vmem %s3, 2
      %v884 = vld [vmem:[%s883] sm:$0x1]
      %v886 = vlaneseq
      %v887 = vshrl.u32 %v886, 7
      %v888 = vsub.s32 0, %v887
      %v889 = vrot.slane %v884, %v888
      %891 = vmatprep.subr.mxu0 0.0
      %892 = vmatpush1.msra.mxu0 %v882
      %893 = vmatprep.subr.mxu0 0.0
      %894 = vmatpush1.msra.mxu0 0.0
      %895 = vmatprep.subr.mxu0 0.0
      %896 = vmatpush1.msra.mxu0 0.0
      %897 = vmatprep.subr.mxu0 0.0
      %898 = vmatpush1.msra.mxu0 0.0
      %899 = vmatprep.subr.mxu0 0.0
      %900 = vmatpush1.msra.mxu0 0.0
      %901 = vmatprep.subr.mxu0 0.0
      %902 = vmatpush1.msra.mxu0 0.0
      %903 = vmatprep.subr.mxu0 0.0
      %904 = vmatpush1.msra.mxu0 0.0
      %905 = vmatprep.subr.mxu0 0.0
      %906 = vmatpush1.msra.mxu0 0.0
      %907 = vmatprep.subr.mxu0 0.0
      %908 = vmatpush1.msra.mxu0 0.0
      %909 = vmatprep.subr.mxu0 0.0
      %910 = vmatpush1.msra.mxu0 0.0
      %911 = vmatprep.subr.mxu0 0.0
      %912 = vmatpush1.msra.mxu0 0.0
      %913 = vmatprep.subr.mxu0 0.0
      %914 = vmatpush1.msra.mxu0 0.0
      %915 = vmatprep.subr.mxu0 0.0
      %916 = vmatpush1.msra.mxu0 0.0
      %917 = vmatprep.subr.mxu0 0.0
      %918 = vmatpush1.msra.mxu0 0.0
      %919 = vmatprep.subr.mxu0 0.0
      %920 = vmatpush1.msra.mxu0 0.0
      %921 = vmatprep.subr.mxu0 0.0
      %922 = vmatpush1.msra.mxu0 0.0
      %923 = vmatprep.subr.mxu0 0.0
      %924 = vmatpush1.msra.mxu0 0.0
      %925 = vmatprep.subr.mxu0 0.0
      %926 = vmatpush1.msra.mxu0 0.0
      %927 = vmatprep.subr.mxu0 0.0
      %928 = vmatpush1.msra.mxu0 0.0
      %929 = vmatprep.subr.mxu0 0.0
      %930 = vmatpush1.msra.mxu0 0.0
      %931 = vmatprep.subr.mxu0 0.0
      %932 = vmatpush1.msra.mxu0 0.0
      %933 = vmatprep.subr.mxu0 0.0
      %934 = vmatpush1.msra.mxu0 0.0
      %935 = vmatprep.subr.mxu0 0.0
      %936 = vmatpush1.msra.mxu0 0.0
      %937 = vmatprep.subr.mxu0 0.0
      %938 = vmatpush1.msra.mxu0 0.0
      %939 = vmatprep.subr.mxu0 0.0
      %940 = vmatpush1.msra.mxu0 0.0
      %941 = vmatprep.subr.mxu0 0.0
      %942 = vmatpush1.msra.mxu0 0.0
      %943 = vmatprep.subr.mxu0 0.0
      %944 = vmatpush1.msra.mxu0 0.0
      %945 = vmatprep.subr.mxu0 0.0
      %946 = vmatpush1.msra.mxu0 0.0
      %947 = vmatprep.subr.mxu0 0.0
      %948 = vmatpush1.msra.mxu0 0.0
      %949 = vmatprep.subr.mxu0 0.0
      %950 = vmatpush1.msra.mxu0 0.0
      %951 = vmatprep.subr.mxu0 0.0
      %952 = vmatpush1.msra.mxu0 0.0
      %953 = vmatprep.subr.mxu0 0.0
      %954 = vmatpush1.msra.mxu0 0.0
      %955 = vmatprep.mubr.f32.mxu0 0.0
      %956 = vmatmul.mubr.f32.gmra.mrb[0].mxu0 %v368
      %v957 = vpop.f32.mrb[0].mxu0
      %v958 = vadd.f32 %v889, %v957
      %v959 = vpop.f32.mrb[0].mxu0
      %960 = vdwg.mxu0
      %vm961 = vcmp.ge.f32.partialorder %v958, 0.0
      %v962 = vmul.f32 %v958, 0.01
      %v963 = vsel %vm961, %v958, %v962
      %s964 = scalar_lea.vmem %s4, 64
      %v965 = vld [vmem:[%s964] sm:$0xff]
      %v966 = vld [vmem:[%s964 + $0x8] sm:$0xff]
      %v967 = vld [vmem:[%s964 + $0x10] sm:$0xff]
      %v968 = vld [vmem:[%s964 + $0x18] sm:$0xff]
      %s969 = scalar_lea.vmem %s5, 2
      %v970 = vld [vmem:[%s969] sm:$0x1]
      %v972 = vlaneseq
      %v973 = vshrl.u32 %v972, 7
      %v974 = vsub.s32 0, %v973
      %v975 = vrot.slane %v970, %v974
      %v978 = vsel %vm454, %v963, 0
      %980 = vmatprep.subr.mxu0 0.0
      %981 = vmatpush1.msra.mxu0 %v965
      %982 = vmatprep.subr.mxu0 0.0
      %983 = vmatpush1.msra.mxu0 %v966
      %984 = vmatprep.subr.mxu0 0.0
      %985 = vmatpush1.msra.mxu0 %v967
      %986 = vmatprep.subr.mxu0 0.0
      %987 = vmatpush1.msra.mxu0 %v968
      %988 = vmatprep.subr.mxu0 0.0
      %989 = vmatpush1.msra.mxu0 0.0
      %990 = vmatprep.subr.mxu0 0.0
      %991 = vmatpush1.msra.mxu0 0.0
      %992 = vmatprep.subr.mxu0 0.0
      %993 = vmatpush1.msra.mxu0 0.0
      %994 = vmatprep.subr.mxu0 0.0
      %995 = vmatpush1.msra.mxu0 0.0
      %996 = vmatprep.subr.mxu0 0.0
      %997 = vmatpush1.msra.mxu0 0.0
      %998 = vmatprep.subr.mxu0 0.0
      %999 = vmatpush1.msra.mxu0 0.0
      %1000 = vmatprep.subr.mxu0 0.0
      %1001 = vmatpush1.msra.mxu0 0.0
      %1002 = vmatprep.subr.mxu0 0.0
      %1003 = vmatpush1.msra.mxu0 0.0
      %1004 = vmatprep.subr.mxu0 0.0
      %1005 = vmatpush1.msra.mxu0 0.0
      %1006 = vmatprep.subr.mxu0 0.0
      %1007 = vmatpush1.msra.mxu0 0.0
      %1008 = vmatprep.subr.mxu0 0.0
      %1009 = vmatpush1.msra.mxu0 0.0
      %1010 = vmatprep.subr.mxu0 0.0
      %1011 = vmatpush1.msra.mxu0 0.0
      %1012 = vmatprep.subr.mxu0 0.0
      %1013 = vmatpush1.msra.mxu0 0.0
      %1014 = vmatprep.subr.mxu0 0.0
      %1015 = vmatpush1.msra.mxu0 0.0
      %1016 = vmatprep.subr.mxu0 0.0
      %1017 = vmatpush1.msra.mxu0 0.0
      %1018 = vmatprep.subr.mxu0 0.0
      %1019 = vmatpush1.msra.mxu0 0.0
      %1020 = vmatprep.subr.mxu0 0.0
      %1021 = vmatpush1.msra.mxu0 0.0
      %1022 = vmatprep.subr.mxu0 0.0
      %1023 = vmatpush1.msra.mxu0 0.0
      %1024 = vmatprep.subr.mxu0 0.0
      %1025 = vmatpush1.msra.mxu0 0.0
      %1026 = vmatprep.subr.mxu0 0.0
      %1027 = vmatpush1.msra.mxu0 0.0
      %1028 = vmatprep.subr.mxu0 0.0
      %1029 = vmatpush1.msra.mxu0 0.0
      %1030 = vmatprep.subr.mxu0 0.0
      %1031 = vmatpush1.msra.mxu0 0.0
      %1032 = vmatprep.subr.mxu0 0.0
      %1033 = vmatpush1.msra.mxu0 0.0
      %1034 = vmatprep.subr.mxu0 0.0
      %1035 = vmatpush1.msra.mxu0 0.0
      %1036 = vmatprep.subr.mxu0 0.0
      %1037 = vmatpush1.msra.mxu0 0.0
      %1038 = vmatprep.subr.mxu0 0.0
      %1039 = vmatpush1.msra.mxu0 0.0
      %1040 = vmatprep.subr.mxu0 0.0
      %1041 = vmatpush1.msra.mxu0 0.0
      %1042 = vmatprep.subr.mxu0 0.0
      %1043 = vmatpush1.msra.mxu0 0.0
      %1044 = vmatprep.mubr.f32.mxu0 0.0
      %1045 = vmatmul.mubr.f32.gmra.mrb[0].mxu0 %v978
      %v1046 = vpop.f32.mrb[0].mxu0
      %v1047 = vadd.f32 %v975, %v1046
      %v1048 = vpop.f32.mrb[0].mxu0
      %1049 = vdwg.mxu0
      %vm1050 = vcmp.ge.f32.partialorder %v1047, 0.0
      %v1051 = vmul.f32 %v1047, 0.01
      %v1052 = vsel %vm1050, %v1047, %v1051
      %s1053 = scalar_lea.vmem %s6, 64
      %v1054 = vld [vmem:[%s1053] sm:$0xff]
      %v1055 = vld [vmem:[%s1053 + $0x8] sm:$0xff]
      %v1056 = vld [vmem:[%s1053 + $0x10] sm:$0xff]
      %v1057 = vld [vmem:[%s1053 + $0x18] sm:$0xff]
      %s1058 = scalar_lea.vmem %s7, 2
      %v1059 = vld [vmem:[%s1058] sm:$0x1]
      %v1061 = vlaneseq
      %v1062 = vshrl.u32 %v1061, 7
      %v1063 = vsub.s32 0, %v1062
      %v1064 = vrot.slane %v1059, %v1063
      %v1067 = vsel %vm454, %v1052, 0
      %1069 = vmatprep.subr.mxu0 0.0
      %1070 = vmatpush1.msra.mxu0 %v1054
      %1071 = vmatprep.subr.mxu0 0.0
      %1072 = vmatpush1.msra.mxu0 %v1055
      %1073 = vmatprep.subr.mxu0 0.0
      %1074 = vmatpush1.msra.mxu0 %v1056
      %1075 = vmatprep.subr.mxu0 0.0
      %1076 = vmatpush1.msra.mxu0 %v1057
      %1077 = vmatprep.subr.mxu0 0.0
      %1078 = vmatpush1.msra.mxu0 0.0
      %1079 = vmatprep.subr.mxu0 0.0
      %1080 = vmatpush1.msra.mxu0 0.0
      %1081 = vmatprep.subr.mxu0 0.0
      %1082 = vmatpush1.msra.mxu0 0.0
      %1083 = vmatprep.subr.mxu0 0.0
      %1084 = vmatpush1.msra.mxu0 0.0
      %1085 = vmatprep.subr.mxu0 0.0
      %1086 = vmatpush1.msra.mxu0 0.0
      %1087 = vmatprep.subr.mxu0 0.0
      %1088 = vmatpush1.msra.mxu0 0.0
      %1089 = vmatprep.subr.mxu0 0.0
      %1090 = vmatpush1.msra.mxu0 0.0
      %1091 = vmatprep.subr.mxu0 0.0
      %1092 = vmatpush1.msra.mxu0 0.0
      %1093 = vmatprep.subr.mxu0 0.0
      %1094 = vmatpush1.msra.mxu0 0.0
      %1095 = vmatprep.subr.mxu0 0.0
      %1096 = vmatpush1.msra.mxu0 0.0
      %1097 = vmatprep.subr.mxu0 0.0
      %1098 = vmatpush1.msra.mxu0 0.0
      %1099 = vmatprep.subr.mxu0 0.0
      %1100 = vmatpush1.msra.mxu0 0.0
      %1101 = vmatprep.subr.mxu0 0.0
      %1102 = vmatpush1.msra.mxu0 0.0
      %1103 = vmatprep.subr.mxu0 0.0
      %1104 = vmatpush1.msra.mxu0 0.0
      %1105 = vmatprep.subr.mxu0 0.0
      %1106 = vmatpush1.msra.mxu0 0.0
      %1107 = vmatprep.subr.mxu0 0.0
      %1108 = vmatpush1.msra.mxu0 0.0
      %1109 = vmatprep.subr.mxu0 0.0
      %1110 = vmatpush1.msra.mxu0 0.0
      %1111 = vmatprep.subr.mxu0 0.0
      %1112 = vmatpush1.msra.mxu0 0.0
      %1113 = vmatprep.subr.mxu0 0.0
      %1114 = vmatpush1.msra.mxu0 0.0
      %1115 = vmatprep.subr.mxu0 0.0
      %1116 = vmatpush1.msra.mxu0 0.0
      %1117 = vmatprep.subr.mxu0 0.0
      %1118 = vmatpush1.msra.mxu0 0.0
      %1119 = vmatprep.subr.mxu0 0.0
      %1120 = vmatpush1.msra.mxu0 0.0
      %1121 = vmatprep.subr.mxu0 0.0
      %1122 = vmatpush1.msra.mxu0 0.0
      %1123 = vmatprep.subr.mxu0 0.0
      %1124 = vmatpush1.msra.mxu0 0.0
      %1125 = vmatprep.subr.mxu0 0.0
      %1126 = vmatpush1.msra.mxu0 0.0
      %1127 = vmatprep.subr.mxu0 0.0
      %1128 = vmatpush1.msra.mxu0 0.0
      %1129 = vmatprep.subr.mxu0 0.0
      %1130 = vmatpush1.msra.mxu0 0.0
      %1131 = vmatprep.subr.mxu0 0.0
      %1132 = vmatpush1.msra.mxu0 0.0
      %1133 = vmatprep.mubr.f32.mxu0 0.0
      %1134 = vmatmul.mubr.f32.gmra.mrb[0].mxu0 %v1067
      %v1135 = vpop.f32.mrb[0].mxu0
      %v1136 = vadd.f32 %v1064, %v1135
      %v1137 = vpop.f32.mrb[0].mxu0
      %1138 = vdwg.mxu0
      %vm1139 = vcmp.ge.f32.partialorder %v1136, 0.0
      %v1140 = vmul.f32 %v1136, 0.01
      %v1141 = vsel %vm1139, %v1136, %v1140
      %s1142 = scalar_lea.vmem %s2, 24
      %v1143 = vld [vmem:[%s1142] sm:$0xff]
      %s1144 = scalar_lea.vmem %s3, 3
      %v1145 = vld [vmem:[%s1144] sm:$0x1]
      %v1147 = vlaneseq
      %v1148 = vshrl.u32 %v1147, 7
      %v1149 = vsub.s32 0, %v1148
      %v1150 = vrot.slane %v1145, %v1149
      %1152 = vmatprep.subr.mxu0 0.0
      %1153 = vmatpush1.msra.mxu0 %v1143
      %1154 = vmatprep.subr.mxu0 0.0
      %1155 = vmatpush1.msra.mxu0 0.0
      %1156 = vmatprep.subr.mxu0 0.0
      %1157 = vmatpush1.msra.mxu0 0.0
      %1158 = vmatprep.subr.mxu0 0.0
      %1159 = vmatpush1.msra.mxu0 0.0
      %1160 = vmatprep.subr.mxu0 0.0
      %1161 = vmatpush1.msra.mxu0 0.0
      %1162 = vmatprep.subr.mxu0 0.0
      %1163 = vmatpush1.msra.mxu0 0.0
      %1164 = vmatprep.subr.mxu0 0.0
      %1165 = vmatpush1.msra.mxu0 0.0
      %1166 = vmatprep.subr.mxu0 0.0
      %1167 = vmatpush1.msra.mxu0 0.0
      %1168 = vmatprep.subr.mxu0 0.0
      %1169 = vmatpush1.msra.mxu0 0.0
      %1170 = vmatprep.subr.mxu0 0.0
      %1171 = vmatpush1.msra.mxu0 0.0
      %1172 = vmatprep.subr.mxu0 0.0
      %1173 = vmatpush1.msra.mxu0 0.0
      %1174 = vmatprep.subr.mxu0 0.0
      %1175 = vmatpush1.msra.mxu0 0.0
      %1176 = vmatprep.subr.mxu0 0.0
      %1177 = vmatpush1.msra.mxu0 0.0
      %1178 = vmatprep.subr.mxu0 0.0
      %1179 = vmatpush1.msra.mxu0 0.0
      %1180 = vmatprep.subr.mxu0 0.0
      %1181 = vmatpush1.msra.mxu0 0.0
      %1182 = vmatprep.subr.mxu0 0.0
      %1183 = vmatpush1.msra.mxu0 0.0
      %1184 = vmatprep.subr.mxu0 0.0
      %1185 = vmatpush1.msra.mxu0 0.0
      %1186 = vmatprep.subr.mxu0 0.0
      %1187 = vmatpush1.msra.mxu0 0.0
      %1188 = vmatprep.subr.mxu0 0.0
      %1189 = vmatpush1.msra.mxu0 0.0
      %1190 = vmatprep.subr.mxu0 0.0
      %1191 = vmatpush1.msra.mxu0 0.0
      %1192 = vmatprep.subr.mxu0 0.0
      %1193 = vmatpush1.msra.mxu0 0.0
      %1194 = vmatprep.subr.mxu0 0.0
      %1195 = vmatpush1.msra.mxu0 0.0
      %1196 = vmatprep.subr.mxu0 0.0
      %1197 = vmatpush1.msra.mxu0 0.0
      %1198 = vmatprep.subr.mxu0 0.0
      %1199 = vmatpush1.msra.mxu0 0.0
      %1200 = vmatprep.subr.mxu0 0.0
      %1201 = vmatpush1.msra.mxu0 0.0
      %1202 = vmatprep.subr.mxu0 0.0
      %1203 = vmatpush1.msra.mxu0 0.0
      %1204 = vmatprep.subr.mxu0 0.0
      %1205 = vmatpush1.msra.mxu0 0.0
      %1206 = vmatprep.subr.mxu0 0.0
      %1207 = vmatpush1.msra.mxu0 0.0
      %1208 = vmatprep.subr.mxu0 0.0
      %1209 = vmatpush1.msra.mxu0 0.0
      %1210 = vmatprep.subr.mxu0 0.0
      %1211 = vmatpush1.msra.mxu0 0.0
      %1212 = vmatprep.subr.mxu0 0.0
      %1213 = vmatpush1.msra.mxu0 0.0
      %1214 = vmatprep.subr.mxu0 0.0
      %1215 = vmatpush1.msra.mxu0 0.0
      %1216 = vmatprep.mubr.f32.mxu0 0.0
      %1217 = vmatmul.mubr.f32.gmra.mrb[0].mxu0 %v368
      %v1218 = vpop.f32.mrb[0].mxu0
      %v1219 = vadd.f32 %v1150, %v1218
      %v1220 = vpop.f32.mrb[0].mxu0
      %1221 = vdwg.mxu0
      %vm1222 = vcmp.ge.f32.partialorder %v1219, 0.0
      %v1223 = vmul.f32 %v1219, 0.01
      %v1224 = vsel %vm1222, %v1219, %v1223
      %s1225 = scalar_lea.vmem %s4, 96
      %v1226 = vld [vmem:[%s1225] sm:$0xff]
      %v1227 = vld [vmem:[%s1225 + $0x8] sm:$0xff]
      %v1228 = vld [vmem:[%s1225 + $0x10] sm:$0xff]
      %v1229 = vld [vmem:[%s1225 + $0x18] sm:$0xff]
      %s1230 = scalar_lea.vmem %s5, 3
      %v1231 = vld [vmem:[%s1230] sm:$0x1]
      %v1233 = vlaneseq
      %v1234 = vshrl.u32 %v1233, 7
      %v1235 = vsub.s32 0, %v1234
      %v1236 = vrot.slane %v1231, %v1235
      %v1239 = vsel %vm454, %v1224, 0
      %1241 = vmatprep.subr.mxu0 0.0
      %1242 = vmatpush1.msra.mxu0 %v1226
      %1243 = vmatprep.subr.mxu0 0.0
      %1244 = vmatpush1.msra.mxu0 %v1227
      %1245 = vmatprep.subr.mxu0 0.0
      %1246 = vmatpush1.msra.mxu0 %v1228
      %1247 = vmatprep.subr.mxu0 0.0
      %1248 = vmatpush1.msra.mxu0 %v1229
      %1249 = vmatprep.subr.mxu0 0.0
      %1250 = vmatpush1.msra.mxu0 0.0
      %1251 = vmatprep.subr.mxu0 0.0
      %1252 = vmatpush1.msra.mxu0 0.0
      %1253 = vmatprep.subr.mxu0 0.0
      %1254 = vmatpush1.msra.mxu0 0.0
      %1255 = vmatprep.subr.mxu0 0.0
      %1256 = vmatpush1.msra.mxu0 0.0
      %1257 = vmatprep.subr.mxu0 0.0
      %1258 = vmatpush1.msra.mxu0 0.0
      %1259 = vmatprep.subr.mxu0 0.0
      %1260 = vmatpush1.msra.mxu0 0.0
      %1261 = vmatprep.subr.mxu0 0.0
      %1262 = vmatpush1.msra.mxu0 0.0
      %1263 = vmatprep.subr.mxu0 0.0
      %1264 = vmatpush1.msra.mxu0 0.0
      %1265 = vmatprep.subr.mxu0 0.0
      %1266 = vmatpush1.msra.mxu0 0.0
      %1267 = vmatprep.subr.mxu0 0.0
      %1268 = vmatpush1.msra.mxu0 0.0
      %1269 = vmatprep.subr.mxu0 0.0
      %1270 = vmatpush1.msra.mxu0 0.0
      %1271 = vmatprep.subr.mxu0 0.0
      %1272 = vmatpush1.msra.mxu0 0.0
      %1273 = vmatprep.subr.mxu0 0.0
      %1274 = vmatpush1.msra.mxu0 0.0
      %1275 = vmatprep.subr.mxu0 0.0
      %1276 = vmatpush1.msra.mxu0 0.0
      %1277 = vmatprep.subr.mxu0 0.0
      %1278 = vmatpush1.msra.mxu0 0.0
      %1279 = vmatprep.subr.mxu0 0.0
      %1280 = vmatpush1.msra.mxu0 0.0
      %1281 = vmatprep.subr.mxu0 0.0
      %1282 = vmatpush1.msra.mxu0 0.0
      %1283 = vmatprep.subr.mxu0 0.0
      %1284 = vmatpush1.msra.mxu0 0.0
      %1285 = vmatprep.subr.mxu0 0.0
      %1286 = vmatpush1.msra.mxu0 0.0
      %1287 = vmatprep.subr.mxu0 0.0
      %1288 = vmatpush1.msra.mxu0 0.0
      %1289 = vmatprep.subr.mxu0 0.0
      %1290 = vmatpush1.msra.mxu0 0.0
      %1291 = vmatprep.subr.mxu0 0.0
      %1292 = vmatpush1.msra.mxu0 0.0
      %1293 = vmatprep.subr.mxu0 0.0
      %1294 = vmatpush1.msra.mxu0 0.0
      %1295 = vmatprep.subr.mxu0 0.0
      %1296 = vmatpush1.msra.mxu0 0.0
      %1297 = vmatprep.subr.mxu0 0.0
      %1298 = vmatpush1.msra.mxu0 0.0
      %1299 = vmatprep.subr.mxu0 0.0
      %1300 = vmatpush1.msra.mxu0 0.0
      %1301 = vmatprep.subr.mxu0 0.0
      %1302 = vmatpush1.msra.mxu0 0.0
      %1303 = vmatprep.subr.mxu0 0.0
      %1304 = vmatpush1.msra.mxu0 0.0
      %1305 = vmatprep.mubr.f32.mxu0 0.0
      %1306 = vmatmul.mubr.f32.gmra.mrb[0].mxu0 %v1239
      %v1307 = vpop.f32.mrb[0].mxu0
      %v1308 = vadd.f32 %v1236, %v1307
      %v1309 = vpop.f32.mrb[0].mxu0
      %1310 = vdwg.mxu0
      %vm1311 = vcmp.ge.f32.partialorder %v1308, 0.0
      %v1312 = vmul.f32 %v1308, 0.01
      %v1313 = vsel %vm1311, %v1308, %v1312
      %s1314 = scalar_lea.vmem %s6, 96
      %v1315 = vld [vmem:[%s1314] sm:$0xff]
      %v1316 = vld [vmem:[%s1314 + $0x8] sm:$0xff]
      %v1317 = vld [vmem:[%s1314 + $0x10] sm:$0xff]
      %v1318 = vld [vmem:[%s1314 + $0x18] sm:$0xff]
      %s1319 = scalar_lea.vmem %s7, 3
      %v1320 = vld [vmem:[%s1319] sm:$0x1]
      %v1322 = vlaneseq
      %v1323 = vshrl.u32 %v1322, 7
      %v1324 = vsub.s32 0, %v1323
      %v1325 = vrot.slane %v1320, %v1324
      %v1328 = vsel %vm454, %v1313, 0
      %1330 = vmatprep.subr.mxu0 0.0
      %1331 = vmatpush1.msra.mxu0 %v1315
      %1332 = vmatprep.subr.mxu0 0.0
      %1333 = vmatpush1.msra.mxu0 %v1316
      %1334 = vmatprep.subr.mxu0 0.0
      %1335 = vmatpush1.msra.mxu0 %v1317
      %1336 = vmatprep.subr.mxu0 0.0
      %1337 = vmatpush1.msra.mxu0 %v1318
      %1338 = vmatprep.subr.mxu0 0.0
      %1339 = vmatpush1.msra.mxu0 0.0
      %1340 = vmatprep.subr.mxu0 0.0
      %1341 = vmatpush1.msra.mxu0 0.0
      %1342 = vmatprep.subr.mxu0 0.0
      %1343 = vmatpush1.msra.mxu0 0.0
      %1344 = vmatprep.subr.mxu0 0.0
      %1345 = vmatpush1.msra.mxu0 0.0
      %1346 = vmatprep.subr.mxu0 0.0
      %1347 = vmatpush1.msra.mxu0 0.0
      %1348 = vmatprep.subr.mxu0 0.0
      %1349 = vmatpush1.msra.mxu0 0.0
      %1350 = vmatprep.subr.mxu0 0.0
      %1351 = vmatpush1.msra.mxu0 0.0
      %1352 = vmatprep.subr.mxu0 0.0
      %1353 = vmatpush1.msra.mxu0 0.0
      %1354 = vmatprep.subr.mxu0 0.0
      %1355 = vmatpush1.msra.mxu0 0.0
      %1356 = vmatprep.subr.mxu0 0.0
      %1357 = vmatpush1.msra.mxu0 0.0
      %1358 = vmatprep.subr.mxu0 0.0
      %1359 = vmatpush1.msra.mxu0 0.0
      %1360 = vmatprep.subr.mxu0 0.0
      %1361 = vmatpush1.msra.mxu0 0.0
      %1362 = vmatprep.subr.mxu0 0.0
      %1363 = vmatpush1.msra.mxu0 0.0
      %1364 = vmatprep.subr.mxu0 0.0
      %1365 = vmatpush1.msra.mxu0 0.0
      %1366 = vmatprep.subr.mxu0 0.0
      %1367 = vmatpush1.msra.mxu0 0.0
      %1368 = vmatprep.subr.mxu0 0.0
      %1369 = vmatpush1.msra.mxu0 0.0
      %1370 = vmatprep.subr.mxu0 0.0
      %1371 = vmatpush1.msra.mxu0 0.0
      %1372 = vmatprep.subr.mxu0 0.0
      %1373 = vmatpush1.msra.mxu0 0.0
      %1374 = vmatprep.subr.mxu0 0.0
      %1375 = vmatpush1.msra.mxu0 0.0
      %1376 = vmatprep.subr.mxu0 0.0
      %1377 = vmatpush1.msra.mxu0 0.0
      %1378 = vmatprep.subr.mxu0 0.0
      %1379 = vmatpush1.msra.mxu0 0.0
      %1380 = vmatprep.subr.mxu0 0.0
      %1381 = vmatpush1.msra.mxu0 0.0
      %1382 = vmatprep.subr.mxu0 0.0
      %1383 = vmatpush1.msra.mxu0 0.0
      %1384 = vmatprep.subr.mxu0 0.0
      %1385 = vmatpush1.msra.mxu0 0.0
      %1386 = vmatprep.subr.mxu0 0.0
      %1387 = vmatpush1.msra.mxu0 0.0
      %1388 = vmatprep.subr.mxu0 0.0
      %1389 = vmatpush1.msra.mxu0 0.0
      %1390 = vmatprep.subr.mxu0 0.0
      %1391 = vmatpush1.msra.mxu0 0.0
      %1392 = vmatprep.subr.mxu0 0.0
      %1393 = vmatpush1.msra.mxu0 0.0
      %1394 = vmatprep.mubr.f32.mxu0 0.0
      %1395 = vmatmul.mubr.f32.gmra.mrb[0].mxu0 %v1328
      %v1396 = vpop.f32.mrb[0].mxu0
      %v1397 = vadd.f32 %v1325, %v1396
      %v1398 = vpop.f32.mrb[0].mxu0
      %1399 = vdwg.mxu0
      %vm1400 = vcmp.ge.f32.partialorder %v1397, 0.0
      %v1401 = vmul.f32 %v1397, 0.01
      %v1402 = vsel %vm1400, %v1397, %v1401
      %v1403 = vmul.f32 %v618, 1.442695
      %v1404 = vpow.pop %v1403
      %1406 = vrot.lane.b32.xlu0 %v1404, 2
      %v1407 = vpop.permute.xlu0 %1406
      %v1409 = vmul.f32 %v356, %v1407
      %1411 = vrot.lane.b32.xlu0 %v1141, 2
      %v1412 = vpop.permute.xlu0 %1411
      %v1414 = vadd.f32 %v1409, %v1412
      %v1415 = vmul.f32 %v880, 1.442695
      %v1416 = vpow.pop %v1415
      %v1417 = vmul.f32 %v356, %v1416
      %v1418 = vadd.f32 %v1417, %v1402
      %1420 = vrot.lane.b32.xlu0 %v1414, 126
      %v1421 = vpop.permute.xlu0 %1420
      %1424 = vrot.lane.b32.xlu0 %v1418, 2
      %v1425 = vpop.permute.xlu0 %1424
      %vm1427 = vcmask 15360
      %v1428 = vsel %vm1427, %v1421, %v1425
      %vm1429 = vcmask 31744
      %1430 = vst.msk [vmem:[%s351] sm:$0xff] %vm1429, %v1428
      %v1431 = vsel %vm1427, %v618, 0.0
      %1432 = vadd.xlane.f32.xlu0 %v1431
      %v1433 = vpop.xlane.xlu0 %1432
      %v1434 = vsel %vm1427, %v880, 0.0
      %1435 = vadd.xlane.f32.xlu0 %v1434
      %v1436 = vpop.xlane.xlu0 %1435
      %v1437 = vadd.f32 %v1433, %v1436
      %vm1438 = vcmask 7168
      %1439 = vst.msk [vmem:[%s355] sm:$0xff] %vm1438, %v1437
      %p1440 = scmp.lt.s32.totalorder %s21, 1
      %s1441 = scalar_select %p1440, %s21, 1
      %s1442 = smul.addr %s1441, 8
      %s1443 = scalar_lea.vmem %s8, %s1442
      %p1444 = scmp.lt.s32.totalorder %s21, 1
      %s1445 = scalar_select %p1444, %s21, 1
      %s1446 = smul.addr %s1445, 8
      %s1447 = scalar_lea.vmem %s9, %s1446
      // Predicated region
      $region53: #{tpu_custom_call.1} parent=51 // pred_check
        %p1448 = pneg %p217
      $region54: #{tpu_custom_call.1} parent=51 // pred_check_branch
        %1450 = sbr.rel (%p1448) target = $region56
      $region55: #{tpu_custom_call.1} parent=51 // pred_region
        _
      $region56: #{tpu_custom_call.1} parent=51 // pred_fallthru
        _
      // Predicated region
      $region57: #{tpu_custom_call.1} parent=51 // pred_check
        %p1451 = pneg %p243
      $region58: #{tpu_custom_call.1} parent=51 // pred_check_branch
        %1453 = sbr.rel (%p1451) target = $region60
      $region59: #{tpu_custom_call.1} parent=51 // pred_region
        _
      $region60: #{tpu_custom_call.1} parent=51 // pred_fallthru
        _
    $region52: #{tpu_custom_call.1} parent=5 // pred_fallthru
      _
    %p1454 = scmp.le.s32.totalorder 2, %s16
    // Predicated region
    $region61: #{tpu_custom_call.1} parent=5 // pred_check
      %p1455 = pneg %p1454
    $region62: #{tpu_custom_call.1} parent=5 // pred_check_branch
      %1457 = sbr.rel (%p1455) target = $region64
    $region63: #{tpu_custom_call.1} parent=5 // pred_region
      %s1458 = ssub.s32 %s16, 2
      // Predicated region
      $region65: #{tpu_custom_call.1} parent=63 // pred_check
        %p1459 = pneg %p223
      $region66: #{tpu_custom_call.1} parent=63 // pred_check_branch
        %1461 = sbr.rel (%p1459) target = $region68
      $region67: #{tpu_custom_call.1} parent=63 // pred_region
        %p1462 = scmp.lt.s32.totalorder %s22, 1
        %s1463 = scalar_select %p1462, %s22, 1
        %s1464 = smul.addr %s1463, 8
        %s1465 = scalar_lea.vmem %s8, %s1464
      $region68: #{tpu_custom_call.1} parent=63 // pred_fallthru
        _
      // Predicated region
      $region69: #{tpu_custom_call.1} parent=63 // pred_check
        %p1466 = pneg %p249
      $region70: #{tpu_custom_call.1} parent=63 // pred_check_branch
        %1468 = sbr.rel (%p1466) target = $region72
      $region71: #{tpu_custom_call.1} parent=63 // pred_region
        %p1469 = scmp.lt.s32.totalorder %s22, 1
        %s1470 = scalar_select %p1469, %s22, 1
        %s1471 = smul.addr %s1470, 8
        %s1472 = scalar_lea.vmem %s9, %s1471
      $region72: #{tpu_custom_call.1} parent=63 // pred_fallthru
        _
    $region64: #{tpu_custom_call.1} parent=5 // pred_fallthru
      _
  $region6: #{tpu_custom_call.1} parent=0 // loop_footer
    %s20 = sadd.s32 1, %s16
  $region7: #{tpu_custom_call.1} parent=0 // loop_footer_branch
    %15 = sbr.rel target = $region3
  $region8: #{tpu_custom_call.1} parent=0 // loop_exit
    _

</llo_original>
